<compile_context>
chip_gen: v6e
topology: v6e:2x2x1
jax: 0.10.0
libtpu: 0.0.40
codegen_flags: <defaults>
</compile_context>

<pallas_src>
import jax
import jax.numpy as jnp
import numpy as np
from jax.experimental import pallas as pl
from jax.experimental.pallas import tpu as pltpu

# ----- model hyperparameters (small, consistent with the module) -----
DICT_SIZE = 50        # dict_size
EMBED_NUM = 16        # embedding_num  (E)
HIDDEN_NUM = 32       # hidden_num     (H)
MAX_LEN = 8           # max_len        (T)
CLS_NUM = 4           # cls_num        (C)
CLS_PAD = 128         # lane-dense classifier width (first C lanes are real)
BATCH = 2             # B


def _lstm_cls_kernel(tok_ref, emb_ref, wx_ref, wh_ref, b_ref, wc_ref, bc_ref,
                     res_ref, logit_ref, pred_ref):
    """Fused embedding gather + LSTM recurrence + classifier + argmax.

    tok_ref  : (B, T)      int32 token ids (SMEM, scalar prefetch)
    emb_ref  : (V, E)      embedding table
    wx_ref   : (E, 4H)     input->gate weights, column order [F | I | O | C]
    wh_ref   : (H, 4H)     hidden->gate weights, same column order
    b_ref    : (1, 4H)     gate biases
    wc_ref   : (T*H, CP)   classifier weight, zero-padded to CP=128 lanes
    bc_ref   : (1, CP)     classifier bias, zero-padded
    res_ref  : (B, T*H)    flattened per-step hidden states (lane-dense)
    logit_ref: (B, CP)     classifier logits (first C lanes valid)
    pred_ref : (B, 1)      int32 argmax over the C valid lanes
    """
    B = res_ref.shape[0]
    H = wh_ref.shape[0]
    T = res_ref.shape[1] // H
    CP = logit_ref.shape[1]
    C = CLS_NUM

    # ---- in-kernel embedding gather: time-major rows (t, b) ----------------
    rows = []
    for t in range(T):
        for bi in range(B):
            tok = tok_ref[bi, t]                         # SMEM scalar read
            rows.append(emb_ref[pl.ds(tok, 1), :])       # (1, E) dynamic row
    x = jnp.concatenate(rows, axis=0)                    # (T*B, E)

    # ---- input projection + bias for ALL timesteps: one MXU matmul ---------
    xproj = jnp.dot(x, wx_ref[...],
                    preferred_element_type=jnp.float32) + b_ref[...]   # (T*B, 4H)
    wh = wh_ref[...]                                                    # (H, 4H)

    a = jnp.zeros((B, H), jnp.float32)
    c = jnp.zeros((B, H), jnp.float32)
    logits = jnp.zeros((B, CP), jnp.float32) + bc_ref[...]

    for t in range(T):  # T=8, fully unrolled (LLO sees the whole serial chain)
        gates = xproj[t * B:(t + 1) * B, :] + jnp.dot(
            a, wh, preferred_element_type=jnp.float32)                  # (B, 4H)

        # Gate order is [F | I | O | C]: one contiguous sigmoid over 3H lanes,
        # tanh only over the H candidate lanes.
        sig = jax.nn.sigmoid(gates[:, :3 * H])
        f = sig[:, 0 * H:1 * H]
        i = sig[:, 1 * H:2 * H]
        o = sig[:, 2 * H:3 * H]
        cc = jnp.tanh(gates[:, 3 * H:4 * H])

        c = f * c + i * cc
        a = o * jnp.tanh(c)

        # Off the critical path: emit h_t and accumulate classifier partials
        # (the MXU is idle during the EUP/VPU phase of the serial recurrence).
        res_ref[:, t * H:(t + 1) * H] = a
        logits = logits + jnp.dot(a, wc_ref[t * H:(t + 1) * H, :],
                                  preferred_element_type=jnp.float32)

    logit_ref[...] = logits

    # ---- in-kernel argmax over the C valid lanes (first-max tie-break) -----
    lane = jax.lax.broadcasted_iota(jnp.int32, (B, CP), 1)
    valid = lane < C
    masked = jnp.where(valid, logits, -jnp.inf)
    mx = jnp.max(masked, axis=-1, keepdims=True)
    hit = jnp.where((masked == mx) & valid, lane, CP)
    pred_ref[...] = jnp.min(hit, axis=-1, keepdims=True).astype(jnp.int32)


@jax.jit
def lstm_text_cls_forward(tokens, params):
    """tokens: (B, T) int32 ids. Returns (result (B,T,H), logits (B,C), preds (B,))."""
    B, T = tokens.shape
    E, H, C, CP = EMBED_NUM, HIDDEN_NUM, CLS_NUM, CLS_PAD

    emb = params["embedding"]        # (V, E)
    wx = params["wx"]                # (E, 4H)
    wh = params["wh"]                # (H, 4H)
    b = params["b_gates"]            # (1, 4H)
    wc = params["w_cls_pad"]         # (T*H, CP)
    bc = params["b_cls_pad"]         # (1, CP)

    grid_spec = pltpu.PrefetchScalarGridSpec(
        num_scalar_prefetch=1,       # tokens -> SMEM, passed to every index_map
        grid=(1,),
        in_specs=[
            pl.BlockSpec(emb.shape, lambda i, tok: (0, 0)),
            pl.BlockSpec((E, 4 * H), lambda i, tok: (0, 0)),
            pl.BlockSpec((H, 4 * H), lambda i, tok: (0, 0)),
            pl.BlockSpec((1, 4 * H), lambda i, tok: (0, 0)),
            pl.BlockSpec((T * H, CP), lambda i, tok: (0, 0)),
            pl.BlockSpec((1, CP), lambda i, tok: (0, 0)),
        ],
        out_specs=[
            pl.BlockSpec((B, T * H), lambda i, tok: (0, 0)),
            pl.BlockSpec((B, CP), lambda i, tok: (0, 0)),
            pl.BlockSpec((B, 1), lambda i, tok: (0, 0)),
        ],
    )

    flops = (2 * (T * B) * E * (4 * H)          # hoisted input projection
             + T * 2 * B * H * (4 * H)          # recurrence matmuls
             + T * 2 * B * H * CP               # per-step classifier partials
             + 12 * T * B * H)                  # elementwise gate math
    transcendentals = T * B * (3 * H + H + H)
    bytes_accessed = 4 * (DICT_SIZE * E + E * 4 * H + H * 4 * H + 4 * H
                          + T * H * CP + CP + B * T
                          + B * T * H + B * CP + B)

    res, logits_pad, preds2 = pl.pallas_call(
        _lstm_cls_kernel,
        out_shape=(
            jax.ShapeDtypeStruct((B, T * H), jnp.float32),
            jax.ShapeDtypeStruct((B, CP), jnp.float32),
            jax.ShapeDtypeStruct((B, 1), jnp.int32),
        ),
        grid_spec=grid_spec,
        compiler_params=pltpu.CompilerParams(
            dimension_semantics=("arbitrary",)),
        cost_estimate=pl.CostEstimate(
            flops=flops,
            transcendentals=transcendentals,
            bytes_accessed=bytes_accessed),
    )(tokens, emb, wx, wh, b, wc, bc)

    result = res.reshape(B, T, H)                # torch row-major flatten inverse
    logits = logits_pad[:, :C]
    preds = preds2[:, 0]                         # torch.argmax(pre, dim=-1)
    return result, logits, preds


def _make_params(key):
    kE, kF, kI, kC, kO, kbF, kbI, kbC, kbO, kWc, kbc = jax.random.split(key, 11)
    E, H, T, C, CP = EMBED_NUM, HIDDEN_NUM, MAX_LEN, CLS_NUM, CLS_PAD
    s = 0.1

    embedding = jax.random.normal(kE, (DICT_SIZE, E), jnp.float32) * s

    # Per-gate Linear(E+H -> H): torch weight is (H, E+H); we store transposed
    # (E+H, H), concatenate gates in [F | I | O | C] column order (so sigmoid
    # covers a contiguous 3H slice), then split into input (E, 4H) and hidden
    # (H, 4H) parts.
    wF = jax.random.normal(kF, (E + H, H), jnp.float32) * s
    wI = jax.random.normal(kI, (E + H, H), jnp.float32) * s
    wC = jax.random.normal(kC, (E + H, H), jnp.float32) * s
    wO = jax.random.normal(kO, (E + H, H), jnp.float32) * s
    w_gates = jnp.concatenate([wF, wI, wO, wC], axis=1)          # (E+H, 4H)
    wx = w_gates[:E]                                             # (E, 4H)
    wh = w_gates[E:]                                             # (H, 4H)

    bF = jax.random.normal(kbF, (H,), jnp.float32) * s
    bI = jax.random.normal(kbI, (H,), jnp.float32) * s
    bC = jax.random.normal(kbC, (H,), jnp.float32) * s
    bO = jax.random.normal(kbO, (H,), jnp.float32) * s
    b_gates = jnp.concatenate([bF, bI, bO, bC])[None, :]         # (1, 4H)

    # classifier Linear(H*T -> C): torch weight (C, T*H); we keep W^T = (T*H, C)
    # and a lane-dense zero-padded copy (T*H, 128) for the kernel.
    w_cls = jax.random.normal(kWc, (T * H, C), jnp.float32) * s  # (T*H, C)
    b_cls = jax.random.normal(kbc, (C,), jnp.float32)[None, :] * s  # (1, C)
    w_cls_pad = jnp.pad(w_cls, ((0, 0), (0, CP - C)))            # (T*H, CP)
    b_cls_pad = jnp.pad(b_cls, ((0, 0), (0, CP - C)))            # (1, CP)

    return {
        "embedding": embedding,
        "wx": wx,
        "wh": wh,
        "b_gates": b_gates,
        "w_cls": w_cls,
        "b_cls": b_cls,
        "w_cls_pad": w_cls_pad,
        "b_cls_pad": b_cls_pad,
    }


def _reference_forward(tokens, params):
    """Pure-JAX mirror of the PyTorch forward, for a correctness check."""
    emb = params["embedding"][tokens]                 # (B, T, E)
    B, T, E = emb.shape
    H = HIDDEN_NUM
    wx, wh, b = params["wx"], params["wh"], params["b_gates"]
    a = jnp.zeros((B, H), jnp.float32)
    c = jnp.zeros((B, H), jnp.float32)
    outs = []
    for t in range(T):
        g = emb[:, t] @ wx + a @ wh + b               # columns: [F | I | O | C]
        f = jax.nn.sigmoid(g[:, :H])
        i = jax.nn.sigmoid(g[:, H:2 * H])
        o = jax.nn.sigmoid(g[:, 2 * H:3 * H])
        cc = jnp.tanh(g[:, 3 * H:4 * H])
        c = f * c + i * cc
        a = o * jnp.tanh(c)
        outs.append(a)
    result = jnp.stack(outs, axis=1)                  # (B, T, H)
    feat = result.reshape(B, -1)
    logits = feat @ params["w_cls"] + params["b_cls"]
    return result, logits, jnp.argmax(logits, axis=-1)


# TODO(synk): the `label is not None` training branch (CrossEntropyLoss) of the
# PyTorch module is not implemented; only the inference forward path is fused.

if __name__ == "__main__":
    key = jax.random.PRNGKey(0)
    kp, kt = jax.random.split(key)
    params = _make_params(kp)
    tokens = jax.random.randint(kt, (BATCH, MAX_LEN), 0, DICT_SIZE, dtype=jnp.int32)

    result, logits, preds = lstm_text_cls_forward(tokens, params)
    jax.block_until_ready((result, logits, preds))

    ref_result, ref_logits, ref_preds = _reference_forward(tokens, params)
    np.testing.assert_allclose(np.asarray(result), np.asarray(ref_result),
                               rtol=1e-4, atol=1e-5)
    np.testing.assert_allclose(np.asarray(logits), np.asarray(ref_logits),
                               rtol=1e-4, atol=1e-5)
    assert np.array_equal(np.asarray(preds), np.asarray(ref_preds))

    print("KERNEL_OK")
</pallas_src>

<mosaic_0001>
module attributes {stable_mosaic.version = 11 : i64} {
  func.func @_lstm_cls_kernel(%arg0: i32, %arg1: memref<2x8xi32, #tpu.memory_space<smem>>, %arg2: memref<50x16xf32, #tpu.memory_space<vmem>>, %arg3: memref<16x128xf32, #tpu.memory_space<vmem>>, %arg4: memref<32x128xf32, #tpu.memory_space<vmem>>, %arg5: memref<1x128xf32, #tpu.memory_space<vmem>>, %arg6: memref<256x128xf32, #tpu.memory_space<vmem>>, %arg7: memref<1x128xf32, #tpu.memory_space<vmem>>, %arg8: memref<2x256xf32, #tpu.memory_space<vmem>>, %arg9: memref<2x128xf32, #tpu.memory_space<vmem>>, %arg10: memref<2x1xi32, #tpu.memory_space<vmem>>) attributes {dimension_semantics = [#tpu.dimension_semantics<arbitrary>], iteration_bounds = array<i64: 1>, scalar_prefetch = 1 : i64, scratch_operands = 0 : i64, tpu.core_type = #tpu.core_type<tc>, window_params = [{pipeline_mode = #tpu.pipeline_mode<synchronous>, transform_indices = @transform_0, window_bounds = array<i64: 50, 16>}, {pipeline_mode = #tpu.pipeline_mode<synchronous>, transform_indices = @transform_1, window_bounds = array<i64: 16, 128>}, {pipeline_mode = #tpu.pipeline_mode<synchronous>, transform_indices = @transform_2, window_bounds = array<i64: 32, 128>}, {pipeline_mode = #tpu.pipeline_mode<synchronous>, transform_indices = @transform_3, window_bounds = array<i64: 1, 128>}, {pipeline_mode = #tpu.pipeline_mode<synchronous>, transform_indices = @transform_4, window_bounds = array<i64: 256, 128>}, {pipeline_mode = #tpu.pipeline_mode<synchronous>, transform_indices = @transform_5, window_bounds = array<i64: 1, 128>}, {pipeline_mode = #tpu.pipeline_mode<synchronous>, transform_indices = @transform_6, window_bounds = array<i64: 2, 256>}, {pipeline_mode = #tpu.pipeline_mode<synchronous>, transform_indices = @transform_7, window_bounds = array<i64: 2, 128>}, {pipeline_mode = #tpu.pipeline_mode<synchronous>, transform_indices = @transform_8, window_bounds = array<i64: 2, 1>}]} {
    %c0 = arith.constant 0 : index
    %c0_0 = arith.constant 0 : index
    %0 = memref.load %arg1[%c0, %c0_0] : memref<2x8xi32, #tpu.memory_space<smem>>
    %1 = arith.index_cast %0 : i32 to index
    %c0_1 = arith.constant 0 : index
    %2 = vector.load %arg2[%1, %c0_1] : memref<50x16xf32, #tpu.memory_space<vmem>>, vector<1x16xf32>
    %c1 = arith.constant 1 : index
    %c0_2 = arith.constant 0 : index
    %3 = memref.load %arg1[%c1, %c0_2] : memref<2x8xi32, #tpu.memory_space<smem>>
    %4 = arith.index_cast %3 : i32 to index
    %c0_3 = arith.constant 0 : index
    %5 = vector.load %arg2[%4, %c0_3] : memref<50x16xf32, #tpu.memory_space<vmem>>, vector<1x16xf32>
    %c0_4 = arith.constant 0 : index
    %c1_5 = arith.constant 1 : index
    %6 = memref.load %arg1[%c0_4, %c1_5] : memref<2x8xi32, #tpu.memory_space<smem>>
    %7 = arith.index_cast %6 : i32 to index
    %c0_6 = arith.constant 0 : index
    %8 = vector.load %arg2[%7, %c0_6] : memref<50x16xf32, #tpu.memory_space<vmem>>, vector<1x16xf32>
    %c1_7 = arith.constant 1 : index
    %c1_8 = arith.constant 1 : index
    %9 = memref.load %arg1[%c1_7, %c1_8] : memref<2x8xi32, #tpu.memory_space<smem>>
    %10 = arith.index_cast %9 : i32 to index
    %c0_9 = arith.constant 0 : index
    %11 = vector.load %arg2[%10, %c0_9] : memref<50x16xf32, #tpu.memory_space<vmem>>, vector<1x16xf32>
    %c0_10 = arith.constant 0 : index
    %c2 = arith.constant 2 : index
    %12 = memref.load %arg1[%c0_10, %c2] : memref<2x8xi32, #tpu.memory_space<smem>>
    %13 = arith.index_cast %12 : i32 to index
    %c0_11 = arith.constant 0 : index
    %14 = vector.load %arg2[%13, %c0_11] : memref<50x16xf32, #tpu.memory_space<vmem>>, vector<1x16xf32>
    %c1_12 = arith.constant 1 : index
    %c2_13 = arith.constant 2 : index
    %15 = memref.load %arg1[%c1_12, %c2_13] : memref<2x8xi32, #tpu.memory_space<smem>>
    %16 = arith.index_cast %15 : i32 to index
    %c0_14 = arith.constant 0 : index
    %17 = vector.load %arg2[%16, %c0_14] : memref<50x16xf32, #tpu.memory_space<vmem>>, vector<1x16xf32>
    %c0_15 = arith.constant 0 : index
    %c3 = arith.constant 3 : index
    %18 = memref.load %arg1[%c0_15, %c3] : memref<2x8xi32, #tpu.memory_space<smem>>
    %19 = arith.index_cast %18 : i32 to index
    %c0_16 = arith.constant 0 : index
    %20 = vector.load %arg2[%19, %c0_16] : memref<50x16xf32, #tpu.memory_space<vmem>>, vector<1x16xf32>
    %c1_17 = arith.constant 1 : index
    %c3_18 = arith.constant 3 : index
    %21 = memref.load %arg1[%c1_17, %c3_18] : memref<2x8xi32, #tpu.memory_space<smem>>
    %22 = arith.index_cast %21 : i32 to index
    %c0_19 = arith.constant 0 : index
    %23 = vector.load %arg2[%22, %c0_19] : memref<50x16xf32, #tpu.memory_space<vmem>>, vector<1x16xf32>
    %c0_20 = arith.constant 0 : index
    %c4 = arith.constant 4 : index
    %24 = memref.load %arg1[%c0_20, %c4] : memref<2x8xi32, #tpu.memory_space<smem>>
    %25 = arith.index_cast %24 : i32 to index
    %c0_21 = arith.constant 0 : index
    %26 = vector.load %arg2[%25, %c0_21] : memref<50x16xf32, #tpu.memory_space<vmem>>, vector<1x16xf32>
    %c1_22 = arith.constant 1 : index
    %c4_23 = arith.constant 4 : index
    %27 = memref.load %arg1[%c1_22, %c4_23] : memref<2x8xi32, #tpu.memory_space<smem>>
    %28 = arith.index_cast %27 : i32 to index
    %c0_24 = arith.constant 0 : index
    %29 = vector.load %arg2[%28, %c0_24] : memref<50x16xf32, #tpu.memory_space<vmem>>, vector<1x16xf32>
    %c0_25 = arith.constant 0 : index
    %c5 = arith.constant 5 : index
    %30 = memref.load %arg1[%c0_25, %c5] : memref<2x8xi32, #tpu.memory_space<smem>>
    %31 = arith.index_cast %30 : i32 to index
    %c0_26 = arith.constant 0 : index
    %32 = vector.load %arg2[%31, %c0_26] : memref<50x16xf32, #tpu.memory_space<vmem>>, vector<1x16xf32>
    %c1_27 = arith.constant 1 : index
    %c5_28 = arith.constant 5 : index
    %33 = memref.load %arg1[%c1_27, %c5_28] : memref<2x8xi32, #tpu.memory_space<smem>>
    %34 = arith.index_cast %33 : i32 to index
    %c0_29 = arith.constant 0 : index
    %35 = vector.load %arg2[%34, %c0_29] : memref<50x16xf32, #tpu.memory_space<vmem>>, vector<1x16xf32>
    %c0_30 = arith.constant 0 : index
    %c6 = arith.constant 6 : index
    %36 = memref.load %arg1[%c0_30, %c6] : memref<2x8xi32, #tpu.memory_space<smem>>
    %37 = arith.index_cast %36 : i32 to index
    %c0_31 = arith.constant 0 : index
    %38 = vector.load %arg2[%37, %c0_31] : memref<50x16xf32, #tpu.memory_space<vmem>>, vector<1x16xf32>
    %c1_32 = arith.constant 1 : index
    %c6_33 = arith.constant 6 : index
    %39 = memref.load %arg1[%c1_32, %c6_33] : memref<2x8xi32, #tpu.memory_space<smem>>
    %40 = arith.index_cast %39 : i32 to index
    %c0_34 = arith.constant 0 : index
    %41 = vector.load %arg2[%40, %c0_34] : memref<50x16xf32, #tpu.memory_space<vmem>>, vector<1x16xf32>
    %c0_35 = arith.constant 0 : index
    %c7 = arith.constant 7 : index
    %42 = memref.load %arg1[%c0_35, %c7] : memref<2x8xi32, #tpu.memory_space<smem>>
    %43 = arith.index_cast %42 : i32 to index
    %c0_36 = arith.constant 0 : index
    %44 = vector.load %arg2[%43, %c0_36] : memref<50x16xf32, #tpu.memory_space<vmem>>, vector<1x16xf32>
    %c1_37 = arith.constant 1 : index
    %c7_38 = arith.constant 7 : index
    %45 = memref.load %arg1[%c1_37, %c7_38] : memref<2x8xi32, #tpu.memory_space<smem>>
    %46 = arith.index_cast %45 : i32 to index
    %c0_39 = arith.constant 0 : index
    %47 = vector.load %arg2[%46, %c0_39] : memref<50x16xf32, #tpu.memory_space<vmem>>, vector<1x16xf32>
    %48 = tpu.concatenate %2, %5, %8, %11, %14, %17, %20, %23, %26, %29, %32, %35, %38, %41, %44, %47 in 0 : vector<1x16xf32>, vector<1x16xf32>, vector<1x16xf32>, vector<1x16xf32>, vector<1x16xf32>, vector<1x16xf32>, vector<1x16xf32>, vector<1x16xf32>, vector<1x16xf32>, vector<1x16xf32>, vector<1x16xf32>, vector<1x16xf32>, vector<1x16xf32>, vector<1x16xf32>, vector<1x16xf32>, vector<1x16xf32> -> vector<16x16xf32>
    %c0_40 = arith.constant 0 : index
    %c0_41 = arith.constant 0 : index
    %49 = vector.load %arg3[%c0_40, %c0_41] : memref<16x128xf32, #tpu.memory_space<vmem>>, vector<16x128xf32>
    %cst = arith.constant dense<0.000000e+00> : vector<16x128xf32>
    %50 = tpu.matmul %48, %49, %cst {dimension_numbers = #tpu.dot_dimension_numbers<[1], [0], [0], [1], [0, 0, 1, 1], [], []>} : vector<16x16xf32>, vector<16x128xf32>, vector<16x128xf32> -> vector<16x128xf32>
    %c0_42 = arith.constant 0 : index
    %c0_43 = arith.constant 0 : index
    %51 = vector.load %arg5[%c0_42, %c0_43] : memref<1x128xf32, #tpu.memory_space<vmem>>, vector<1x128xf32>
    %52 = vector.broadcast %51 : vector<1x128xf32> to vector<16x128xf32>
    %53 = arith.addf %50, %52 : vector<16x128xf32>
    %c0_44 = arith.constant 0 : index
    %c0_45 = arith.constant 0 : index
    %54 = vector.load %arg4[%c0_44, %c0_45] : memref<32x128xf32, #tpu.memory_space<vmem>>, vector<32x128xf32>
    %cst_46 = arith.constant 0.000000e+00 : f32
    %55 = vector.broadcast %cst_46 : f32 to vector<2x32xf32>
    %cst_47 = arith.constant 0.000000e+00 : f32
    %56 = vector.broadcast %cst_47 : f32 to vector<2x32xf32>
    %cst_48 = arith.constant 0.000000e+00 : f32
    %57 = vector.broadcast %cst_48 : f32 to vector<2x128xf32>
    %c0_49 = arith.constant 0 : index
    %c0_50 = arith.constant 0 : index
    %58 = vector.load %arg7[%c0_49, %c0_50] : memref<1x128xf32, #tpu.memory_space<vmem>>, vector<1x128xf32>
    %59 = vector.broadcast %58 : vector<1x128xf32> to vector<2x128xf32>
    %60 = arith.addf %57, %59 : vector<2x128xf32>
    %61 = vector.extract_strided_slice %53 {offsets = [0, 0], sizes = [2, 128], strides = [1, 1]} : vector<16x128xf32> to vector<2x128xf32>
    %cst_51 = arith.constant dense<0.000000e+00> : vector<2x128xf32>
    %62 = tpu.matmul %55, %54, %cst_51 {dimension_numbers = #tpu.dot_dimension_numbers<[1], [0], [0], [1], [0, 0, 1, 1], [], []>} : vector<2x32xf32>, vector<32x128xf32>, vector<2x128xf32> -> vector<2x128xf32>
    %63 = arith.addf %61, %62 : vector<2x128xf32>
    %64 = vector.extract_strided_slice %63 {offsets = [0, 0], sizes = [2, 96], strides = [1, 1]} : vector<2x128xf32> to vector<2x96xf32>
    %65 = arith.negf %64 : vector<2x96xf32>
    %66 = math.exp %65 : vector<2x96xf32>
    %cst_52 = arith.constant 1.000000e+00 : f32
    %67 = vector.broadcast %cst_52 : f32 to vector<2x96xf32>
    %68 = arith.addf %67, %66 : vector<2x96xf32>
    %69 = arith.divf %67, %68 : vector<2x96xf32>
    %70 = vector.extract_strided_slice %69 {offsets = [0, 0], sizes = [2, 32], strides = [1, 1]} : vector<2x96xf32> to vector<2x32xf32>
    %71 = vector.extract_strided_slice %69 {offsets = [0, 32], sizes = [2, 32], strides = [1, 1]} : vector<2x96xf32> to vector<2x32xf32>
    %72 = vector.extract_strided_slice %69 {offsets = [0, 64], sizes = [2, 32], strides = [1, 1]} : vector<2x96xf32> to vector<2x32xf32>
    %73 = vector.extract_strided_slice %63 {offsets = [0, 96], sizes = [2, 32], strides = [1, 1]} : vector<2x128xf32> to vector<2x32xf32>
    %74 = math.tanh %73 : vector<2x32xf32>
    %75 = arith.mulf %70, %56 : vector<2x32xf32>
    %76 = arith.mulf %71, %74 : vector<2x32xf32>
    %77 = arith.addf %75, %76 : vector<2x32xf32>
    %78 = math.tanh %77 : vector<2x32xf32>
    %79 = arith.mulf %72, %78 : vector<2x32xf32>
    %c0_53 = arith.constant 0 : index
    %c0_54 = arith.constant 0 : index
    %80 = vector.load %arg8[%c0_53, %c0_54] : memref<2x256xf32, #tpu.memory_space<vmem>>, vector<2x32xf32>
    tpu.vector_store %arg8[%c0_53, %c0_54], %79 {strides = array<i32>} : memref<2x256xf32, #tpu.memory_space<vmem>>, vector<2x32xf32>,
    %c0_55 = arith.constant 0 : index
    %c0_56 = arith.constant 0 : index
    %81 = vector.load %arg6[%c0_55, %c0_56] : memref<256x128xf32, #tpu.memory_space<vmem>>, vector<32x128xf32>
    %cst_57 = arith.constant dense<0.000000e+00> : vector<2x128xf32>
    %82 = tpu.matmul %79, %81, %cst_57 {dimension_numbers = #tpu.dot_dimension_numbers<[1], [0], [0], [1], [0, 0, 1, 1], [], []>} : vector<2x32xf32>, vector<32x128xf32>, vector<2x128xf32> -> vector<2x128xf32>
    %83 = arith.addf %60, %82 : vector<2x128xf32>
    %84 = vector.extract_strided_slice %53 {offsets = [2, 0], sizes = [2, 128], strides = [1, 1]} : vector<16x128xf32> to vector<2x128xf32>
    %cst_58 = arith.constant dense<0.000000e+00> : vector<2x128xf32>
    %85 = tpu.matmul %79, %54, %cst_58 {dimension_numbers = #tpu.dot_dimension_numbers<[1], [0], [0], [1], [0, 0, 1, 1], [], []>} : vector<2x32xf32>, vector<32x128xf32>, vector<2x128xf32> -> vector<2x128xf32>
    %86 = arith.addf %84, %85 : vector<2x128xf32>
    %87 = vector.extract_strided_slice %86 {offsets = [0, 0], sizes = [2, 96], strides = [1, 1]} : vector<2x128xf32> to vector<2x96xf32>
    %88 = arith.negf %87 : vector<2x96xf32>
    %89 = math.exp %88 : vector<2x96xf32>
    %cst_59 = arith.constant 1.000000e+00 : f32
    %90 = vector.broadcast %cst_59 : f32 to vector<2x96xf32>
    %91 = arith.addf %90, %89 : vector<2x96xf32>
    %92 = arith.divf %90, %91 : vector<2x96xf32>
    %93 = vector.extract_strided_slice %92 {offsets = [0, 0], sizes = [2, 32], strides = [1, 1]} : vector<2x96xf32> to vector<2x32xf32>
    %94 = vector.extract_strided_slice %92 {offsets = [0, 32], sizes = [2, 32], strides = [1, 1]} : vector<2x96xf32> to vector<2x32xf32>
    %95 = vector.extract_strided_slice %92 {offsets = [0, 64], sizes = [2, 32], strides = [1, 1]} : vector<2x96xf32> to vector<2x32xf32>
    %96 = vector.extract_strided_slice %86 {offsets = [0, 96], sizes = [2, 32], strides = [1, 1]} : vector<2x128xf32> to vector<2x32xf32>
    %97 = math.tanh %96 : vector<2x32xf32>
    %98 = arith.mulf %93, %77 : vector<2x32xf32>
    %99 = arith.mulf %94, %97 : vector<2x32xf32>
    %100 = arith.addf %98, %99 : vector<2x32xf32>
    %101 = math.tanh %100 : vector<2x32xf32>
    %102 = arith.mulf %95, %101 : vector<2x32xf32>
    %c0_60 = arith.constant 0 : index
    %c32 = arith.constant 32 : index
    %103 = vector.load %arg8[%c0_60, %c32] : memref<2x256xf32, #tpu.memory_space<vmem>>, vector<2x32xf32>
    tpu.vector_store %arg8[%c0_60, %c32], %102 {strides = array<i32>} : memref<2x256xf32, #tpu.memory_space<vmem>>, vector<2x32xf32>,
    %c32_61 = arith.constant 32 : index
    %c0_62 = arith.constant 0 : index
    %104 = vector.load %arg6[%c32_61, %c0_62] : memref<256x128xf32, #tpu.memory_space<vmem>>, vector<32x128xf32>
    %cst_63 = arith.constant dense<0.000000e+00> : vector<2x128xf32>
    %105 = tpu.matmul %102, %104, %cst_63 {dimension_numbers = #tpu.dot_dimension_numbers<[1], [0], [0], [1], [0, 0, 1, 1], [], []>} : vector<2x32xf32>, vector<32x128xf32>, vector<2x128xf32> -> vector<2x128xf32>
    %106 = arith.addf %83, %105 : vector<2x128xf32>
    %107 = vector.extract_strided_slice %53 {offsets = [4, 0], sizes = [2, 128], strides = [1, 1]} : vector<16x128xf32> to vector<2x128xf32>
    %cst_64 = arith.constant dense<0.000000e+00> : vector<2x128xf32>
    %108 = tpu.matmul %102, %54, %cst_64 {dimension_numbers = #tpu.dot_dimension_numbers<[1], [0], [0], [1], [0, 0, 1, 1], [], []>} : vector<2x32xf32>, vector<32x128xf32>, vector<2x128xf32> -> vector<2x128xf32>
    %109 = arith.addf %107, %108 : vector<2x128xf32>
    %110 = vector.extract_strided_slice %109 {offsets = [0, 0], sizes = [2, 96], strides = [1, 1]} : vector<2x128xf32> to vector<2x96xf32>
    %111 = arith.negf %110 : vector<2x96xf32>
    %112 = math.exp %111 : vector<2x96xf32>
    %cst_65 = arith.constant 1.000000e+00 : f32
    %113 = vector.broadcast %cst_65 : f32 to vector<2x96xf32>
    %114 = arith.addf %113, %112 : vector<2x96xf32>
    %115 = arith.divf %113, %114 : vector<2x96xf32>
    %116 = vector.extract_strided_slice %115 {offsets = [0, 0], sizes = [2, 32], strides = [1, 1]} : vector<2x96xf32> to vector<2x32xf32>
    %117 = vector.extract_strided_slice %115 {offsets = [0, 32], sizes = [2, 32], strides = [1, 1]} : vector<2x96xf32> to vector<2x32xf32>
    %118 = vector.extract_strided_slice %115 {offsets = [0, 64], sizes = [2, 32], strides = [1, 1]} : vector<2x96xf32> to vector<2x32xf32>
    %119 = vector.extract_strided_slice %109 {offsets = [0, 96], sizes = [2, 32], strides = [1, 1]} : vector<2x128xf32> to vector<2x32xf32>
    %120 = math.tanh %119 : vector<2x32xf32>
    %121 = arith.mulf %116, %100 : vector<2x32xf32>
    %122 = arith.mulf %117, %120 : vector<2x32xf32>
    %123 = arith.addf %121, %122 : vector<2x32xf32>
    %124 = math.tanh %123 : vector<2x32xf32>
    %125 = arith.mulf %118, %124 : vector<2x32xf32>
    %c0_66 = arith.constant 0 : index
    %c64 = arith.constant 64 : index
    %126 = vector.load %arg8[%c0_66, %c64] : memref<2x256xf32, #tpu.memory_space<vmem>>, vector<2x32xf32>
    tpu.vector_store %arg8[%c0_66, %c64], %125 {strides = array<i32>} : memref<2x256xf32, #tpu.memory_space<vmem>>, vector<2x32xf32>,
    %c64_67 = arith.constant 64 : index
    %c0_68 = arith.constant 0 : index
    %127 = vector.load %arg6[%c64_67, %c0_68] : memref<256x128xf32, #tpu.memory_space<vmem>>, vector<32x128xf32>
    %cst_69 = arith.constant dense<0.000000e+00> : vector<2x128xf32>
    %128 = tpu.matmul %125, %127, %cst_69 {dimension_numbers = #tpu.dot_dimension_numbers<[1], [0], [0], [1], [0, 0, 1, 1], [], []>} : vector<2x32xf32>, vector<32x128xf32>, vector<2x128xf32> -> vector<2x128xf32>
    %129 = arith.addf %106, %128 : vector<2x128xf32>
    %130 = vector.extract_strided_slice %53 {offsets = [6, 0], sizes = [2, 128], strides = [1, 1]} : vector<16x128xf32> to vector<2x128xf32>
    %cst_70 = arith.constant dense<0.000000e+00> : vector<2x128xf32>
    %131 = tpu.matmul %125, %54, %cst_70 {dimension_numbers = #tpu.dot_dimension_numbers<[1], [0], [0], [1], [0, 0, 1, 1], [], []>} : vector<2x32xf32>, vector<32x128xf32>, vector<2x128xf32> -> vector<2x128xf32>
    %132 = arith.addf %130, %131 : vector<2x128xf32>
    %133 = vector.extract_strided_slice %132 {offsets = [0, 0], sizes = [2, 96], strides = [1, 1]} : vector<2x128xf32> to vector<2x96xf32>
    %134 = arith.negf %133 : vector<2x96xf32>
    %135 = math.exp %134 : vector<2x96xf32>
    %cst_71 = arith.constant 1.000000e+00 : f32
    %136 = vector.broadcast %cst_71 : f32 to vector<2x96xf32>
    %137 = arith.addf %136, %135 : vector<2x96xf32>
    %138 = arith.divf %136, %137 : vector<2x96xf32>
    %139 = vector.extract_strided_slice %138 {offsets = [0, 0], sizes = [2, 32], strides = [1, 1]} : vector<2x96xf32> to vector<2x32xf32>
    %140 = vector.extract_strided_slice %138 {offsets = [0, 32], sizes = [2, 32], strides = [1, 1]} : vector<2x96xf32> to vector<2x32xf32>
    %141 = vector.extract_strided_slice %138 {offsets = [0, 64], sizes = [2, 32], strides = [1, 1]} : vector<2x96xf32> to vector<2x32xf32>
    %142 = vector.extract_strided_slice %132 {offsets = [0, 96], sizes = [2, 32], strides = [1, 1]} : vector<2x128xf32> to vector<2x32xf32>
    %143 = math.tanh %142 : vector<2x32xf32>
    %144 = arith.mulf %139, %123 : vector<2x32xf32>
    %145 = arith.mulf %140, %143 : vector<2x32xf32>
    %146 = arith.addf %144, %145 : vector<2x32xf32>
    %147 = math.tanh %146 : vector<2x32xf32>
    %148 = arith.mulf %141, %147 : vector<2x32xf32>
    %c0_72 = arith.constant 0 : index
    %c96 = arith.constant 96 : index
    %149 = vector.load %arg8[%c0_72, %c96] : memref<2x256xf32, #tpu.memory_space<vmem>>, vector<2x32xf32>
    tpu.vector_store %arg8[%c0_72, %c96], %148 {strides = array<i32>} : memref<2x256xf32, #tpu.memory_space<vmem>>, vector<2x32xf32>,
    %c96_73 = arith.constant 96 : index
    %c0_74 = arith.constant 0 : index
    %150 = vector.load %arg6[%c96_73, %c0_74] : memref<256x128xf32, #tpu.memory_space<vmem>>, vector<32x128xf32>
    %cst_75 = arith.constant dense<0.000000e+00> : vector<2x128xf32>
    %151 = tpu.matmul %148, %150, %cst_75 {dimension_numbers = #tpu.dot_dimension_numbers<[1], [0], [0], [1], [0, 0, 1, 1], [], []>} : vector<2x32xf32>, vector<32x128xf32>, vector<2x128xf32> -> vector<2x128xf32>
    %152 = arith.addf %129, %151 : vector<2x128xf32>
    %153 = vector.extract_strided_slice %53 {offsets = [8, 0], sizes = [2, 128], strides = [1, 1]} : vector<16x128xf32> to vector<2x128xf32>
    %cst_76 = arith.constant dense<0.000000e+00> : vector<2x128xf32>
    %154 = tpu.matmul %148, %54, %cst_76 {dimension_numbers = #tpu.dot_dimension_numbers<[1], [0], [0], [1], [0, 0, 1, 1], [], []>} : vector<2x32xf32>, vector<32x128xf32>, vector<2x128xf32> -> vector<2x128xf32>
    %155 = arith.addf %153, %154 : vector<2x128xf32>
    %156 = vector.extract_strided_slice %155 {offsets = [0, 0], sizes = [2, 96], strides = [1, 1]} : vector<2x128xf32> to vector<2x96xf32>
    %157 = arith.negf %156 : vector<2x96xf32>
    %158 = math.exp %157 : vector<2x96xf32>
    %cst_77 = arith.constant 1.000000e+00 : f32
    %159 = vector.broadcast %cst_77 : f32 to vector<2x96xf32>
    %160 = arith.addf %159, %158 : vector<2x96xf32>
    %161 = arith.divf %159, %160 : vector<2x96xf32>
    %162 = vector.extract_strided_slice %161 {offsets = [0, 0], sizes = [2, 32], strides = [1, 1]} : vector<2x96xf32> to vector<2x32xf32>
    %163 = vector.extract_strided_slice %161 {offsets = [0, 32], sizes = [2, 32], strides = [1, 1]} : vector<2x96xf32> to vector<2x32xf32>
    %164 = vector.extract_strided_slice %161 {offsets = [0, 64], sizes = [2, 32], strides = [1, 1]} : vector<2x96xf32> to vector<2x32xf32>
    %165 = vector.extract_strided_slice %155 {offsets = [0, 96], sizes = [2, 32], strides = [1, 1]} : vector<2x128xf32> to vector<2x32xf32>
    %166 = math.tanh %165 : vector<2x32xf32>
    %167 = arith.mulf %162, %146 : vector<2x32xf32>
    %168 = arith.mulf %163, %166 : vector<2x32xf32>
    %169 = arith.addf %167, %168 : vector<2x32xf32>
    %170 = math.tanh %169 : vector<2x32xf32>
    %171 = arith.mulf %164, %170 : vector<2x32xf32>
    %c0_78 = arith.constant 0 : index
    %c128 = arith.constant 128 : index
    %172 = vector.load %arg8[%c0_78, %c128] : memref<2x256xf32, #tpu.memory_space<vmem>>, vector<2x32xf32>
    tpu.vector_store %arg8[%c0_78, %c128], %171 {strides = array<i32>} : memref<2x256xf32, #tpu.memory_space<vmem>>, vector<2x32xf32>,
    %c128_79 = arith.constant 128 : index
    %c0_80 = arith.constant 0 : index
    %173 = vector.load %arg6[%c128_79, %c0_80] : memref<256x128xf32, #tpu.memory_space<vmem>>, vector<32x128xf32>
    %cst_81 = arith.constant dense<0.000000e+00> : vector<2x128xf32>
    %174 = tpu.matmul %171, %173, %cst_81 {dimension_numbers = #tpu.dot_dimension_numbers<[1], [0], [0], [1], [0, 0, 1, 1], [], []>} : vector<2x32xf32>, vector<32x128xf32>, vector<2x128xf32> -> vector<2x128xf32>
    %175 = arith.addf %152, %174 : vector<2x128xf32>
    %176 = vector.extract_strided_slice %53 {offsets = [10, 0], sizes = [2, 128], strides = [1, 1]} : vector<16x128xf32> to vector<2x128xf32>
    %cst_82 = arith.constant dense<0.000000e+00> : vector<2x128xf32>
    %177 = tpu.matmul %171, %54, %cst_82 {dimension_numbers = #tpu.dot_dimension_numbers<[1], [0], [0], [1], [0, 0, 1, 1], [], []>} : vector<2x32xf32>, vector<32x128xf32>, vector<2x128xf32> -> vector<2x128xf32>
    %178 = arith.addf %176, %177 : vector<2x128xf32>
    %179 = vector.extract_strided_slice %178 {offsets = [0, 0], sizes = [2, 96], strides = [1, 1]} : vector<2x128xf32> to vector<2x96xf32>
    %180 = arith.negf %179 : vector<2x96xf32>
    %181 = math.exp %180 : vector<2x96xf32>
    %cst_83 = arith.constant 1.000000e+00 : f32
    %182 = vector.broadcast %cst_83 : f32 to vector<2x96xf32>
    %183 = arith.addf %182, %181 : vector<2x96xf32>
    %184 = arith.divf %182, %183 : vector<2x96xf32>
    %185 = vector.extract_strided_slice %184 {offsets = [0, 0], sizes = [2, 32], strides = [1, 1]} : vector<2x96xf32> to vector<2x32xf32>
    %186 = vector.extract_strided_slice %184 {offsets = [0, 32], sizes = [2, 32], strides = [1, 1]} : vector<2x96xf32> to vector<2x32xf32>
    %187 = vector.extract_strided_slice %184 {offsets = [0, 64], sizes = [2, 32], strides = [1, 1]} : vector<2x96xf32> to vector<2x32xf32>
    %188 = vector.extract_strided_slice %178 {offsets = [0, 96], sizes = [2, 32], strides = [1, 1]} : vector<2x128xf32> to vector<2x32xf32>
    %189 = math.tanh %188 : vector<2x32xf32>
    %190 = arith.mulf %185, %169 : vector<2x32xf32>
    %191 = arith.mulf %186, %189 : vector<2x32xf32>
    %192 = arith.addf %190, %191 : vector<2x32xf32>
    %193 = math.tanh %192 : vector<2x32xf32>
    %194 = arith.mulf %187, %193 : vector<2x32xf32>
    %c0_84 = arith.constant 0 : index
    %c160 = arith.constant 160 : index
    %195 = vector.load %arg8[%c0_84, %c160] : memref<2x256xf32, #tpu.memory_space<vmem>>, vector<2x32xf32>
    tpu.vector_store %arg8[%c0_84, %c160], %194 {strides = array<i32>} : memref<2x256xf32, #tpu.memory_space<vmem>>, vector<2x32xf32>,
    %c160_85 = arith.constant 160 : index
    %c0_86 = arith.constant 0 : index
    %196 = vector.load %arg6[%c160_85, %c0_86] : memref<256x128xf32, #tpu.memory_space<vmem>>, vector<32x128xf32>
    %cst_87 = arith.constant dense<0.000000e+00> : vector<2x128xf32>
    %197 = tpu.matmul %194, %196, %cst_87 {dimension_numbers = #tpu.dot_dimension_numbers<[1], [0], [0], [1], [0, 0, 1, 1], [], []>} : vector<2x32xf32>, vector<32x128xf32>, vector<2x128xf32> -> vector<2x128xf32>
    %198 = arith.addf %175, %197 : vector<2x128xf32>
    %199 = vector.extract_strided_slice %53 {offsets = [12, 0], sizes = [2, 128], strides = [1, 1]} : vector<16x128xf32> to vector<2x128xf32>
    %cst_88 = arith.constant dense<0.000000e+00> : vector<2x128xf32>
    %200 = tpu.matmul %194, %54, %cst_88 {dimension_numbers = #tpu.dot_dimension_numbers<[1], [0], [0], [1], [0, 0, 1, 1], [], []>} : vector<2x32xf32>, vector<32x128xf32>, vector<2x128xf32> -> vector<2x128xf32>
    %201 = arith.addf %199, %200 : vector<2x128xf32>
    %202 = vector.extract_strided_slice %201 {offsets = [0, 0], sizes = [2, 96], strides = [1, 1]} : vector<2x128xf32> to vector<2x96xf32>
    %203 = arith.negf %202 : vector<2x96xf32>
    %204 = math.exp %203 : vector<2x96xf32>
    %cst_89 = arith.constant 1.000000e+00 : f32
    %205 = vector.broadcast %cst_89 : f32 to vector<2x96xf32>
    %206 = arith.addf %205, %204 : vector<2x96xf32>
    %207 = arith.divf %205, %206 : vector<2x96xf32>
    %208 = vector.extract_strided_slice %207 {offsets = [0, 0], sizes = [2, 32], strides = [1, 1]} : vector<2x96xf32> to vector<2x32xf32>
    %209 = vector.extract_strided_slice %207 {offsets = [0, 32], sizes = [2, 32], strides = [1, 1]} : vector<2x96xf32> to vector<2x32xf32>
    %210 = vector.extract_strided_slice %207 {offsets = [0, 64], sizes = [2, 32], strides = [1, 1]} : vector<2x96xf32> to vector<2x32xf32>
    %211 = vector.extract_strided_slice %201 {offsets = [0, 96], sizes = [2, 32], strides = [1, 1]} : vector<2x128xf32> to vector<2x32xf32>
    %212 = math.tanh %211 : vector<2x32xf32>
    %213 = arith.mulf %208, %192 : vector<2x32xf32>
    %214 = arith.mulf %209, %212 : vector<2x32xf32>
    %215 = arith.addf %213, %214 : vector<2x32xf32>
    %216 = math.tanh %215 : vector<2x32xf32>
    %217 = arith.mulf %210, %216 : vector<2x32xf32>
    %c0_90 = arith.constant 0 : index
    %c192 = arith.constant 192 : index
    %218 = vector.load %arg8[%c0_90, %c192] : memref<2x256xf32, #tpu.memory_space<vmem>>, vector<2x32xf32>
    tpu.vector_store %arg8[%c0_90, %c192], %217 {strides = array<i32>} : memref<2x256xf32, #tpu.memory_space<vmem>>, vector<2x32xf32>,
    %c192_91 = arith.constant 192 : index
    %c0_92 = arith.constant 0 : index
    %219 = vector.load %arg6[%c192_91, %c0_92] : memref<256x128xf32, #tpu.memory_space<vmem>>, vector<32x128xf32>
    %cst_93 = arith.constant dense<0.000000e+00> : vector<2x128xf32>
    %220 = tpu.matmul %217, %219, %cst_93 {dimension_numbers = #tpu.dot_dimension_numbers<[1], [0], [0], [1], [0, 0, 1, 1], [], []>} : vector<2x32xf32>, vector<32x128xf32>, vector<2x128xf32> -> vector<2x128xf32>
    %221 = arith.addf %198, %220 : vector<2x128xf32>
    %222 = vector.extract_strided_slice %53 {offsets = [14, 0], sizes = [2, 128], strides = [1, 1]} : vector<16x128xf32> to vector<2x128xf32>
    %cst_94 = arith.constant dense<0.000000e+00> : vector<2x128xf32>
    %223 = tpu.matmul %217, %54, %cst_94 {dimension_numbers = #tpu.dot_dimension_numbers<[1], [0], [0], [1], [0, 0, 1, 1], [], []>} : vector<2x32xf32>, vector<32x128xf32>, vector<2x128xf32> -> vector<2x128xf32>
    %224 = arith.addf %222, %223 : vector<2x128xf32>
    %225 = vector.extract_strided_slice %224 {offsets = [0, 0], sizes = [2, 96], strides = [1, 1]} : vector<2x128xf32> to vector<2x96xf32>
    %226 = arith.negf %225 : vector<2x96xf32>
    %227 = math.exp %226 : vector<2x96xf32>
    %cst_95 = arith.constant 1.000000e+00 : f32
    %228 = vector.broadcast %cst_95 : f32 to vector<2x96xf32>
    %229 = arith.addf %228, %227 : vector<2x96xf32>
    %230 = arith.divf %228, %229 : vector<2x96xf32>
    %231 = vector.extract_strided_slice %230 {offsets = [0, 0], sizes = [2, 32], strides = [1, 1]} : vector<2x96xf32> to vector<2x32xf32>
    %232 = vector.extract_strided_slice %230 {offsets = [0, 32], sizes = [2, 32], strides = [1, 1]} : vector<2x96xf32> to vector<2x32xf32>
    %233 = vector.extract_strided_slice %230 {offsets = [0, 64], sizes = [2, 32], strides = [1, 1]} : vector<2x96xf32> to vector<2x32xf32>
    %234 = vector.extract_strided_slice %224 {offsets = [0, 96], sizes = [2, 32], strides = [1, 1]} : vector<2x128xf32> to vector<2x32xf32>
    %235 = math.tanh %234 : vector<2x32xf32>
    %236 = arith.mulf %231, %215 : vector<2x32xf32>
    %237 = arith.mulf %232, %235 : vector<2x32xf32>
    %238 = arith.addf %236, %237 : vector<2x32xf32>
    %239 = math.tanh %238 : vector<2x32xf32>
    %240 = arith.mulf %233, %239 : vector<2x32xf32>
    %c0_96 = arith.constant 0 : index
    %c224 = arith.constant 224 : index
    %241 = vector.load %arg8[%c0_96, %c224] : memref<2x256xf32, #tpu.memory_space<vmem>>, vector<2x32xf32>
    tpu.vector_store %arg8[%c0_96, %c224], %240 {strides = array<i32>} : memref<2x256xf32, #tpu.memory_space<vmem>>, vector<2x32xf32>,
    %c224_97 = arith.constant 224 : index
    %c0_98 = arith.constant 0 : index
    %242 = vector.load %arg6[%c224_97, %c0_98] : memref<256x128xf32, #tpu.memory_space<vmem>>, vector<32x128xf32>
    %cst_99 = arith.constant dense<0.000000e+00> : vector<2x128xf32>
    %243 = tpu.matmul %240, %242, %cst_99 {dimension_numbers = #tpu.dot_dimension_numbers<[1], [0], [0], [1], [0, 0, 1, 1], [], []>} : vector<2x32xf32>, vector<32x128xf32>, vector<2x128xf32> -> vector<2x128xf32>
    %244 = arith.addf %221, %243 : vector<2x128xf32>
    %c0_100 = arith.constant 0 : index
    %c0_101 = arith.constant 0 : index
    %245 = vector.load %arg9[%c0_100, %c0_101] : memref<2x128xf32, #tpu.memory_space<vmem>>, vector<2x128xf32>
    tpu.vector_store %arg9[%c0_100, %c0_101], %244 {strides = array<i32>} : memref<2x128xf32, #tpu.memory_space<vmem>>, vector<2x128xf32>,
    %246 = tpu.iota {dimensions = array<i32: 1>} : vector<2x128xi32>
    %c4_i32 = arith.constant 4 : i32
    %247 = vector.broadcast %c4_i32 : i32 to vector<2x128xi32>
    %248 = arith.cmpi slt, %246, %247 : vector<2x128xi32>
    %cst_102 = arith.constant 0xFF800000 : f32
    %249 = vector.broadcast %cst_102 : f32 to vector<2x128xf32>
    %250 = arith.select %248, %244, %249 : vector<2x128xi1>, vector<2x128xf32>
    %cst_103 = arith.constant dense<0xFF800000> : vector<2xf32>
    %251 = vector.multi_reduction <maximumf>, %250, %cst_103 [1] : vector<2x128xf32> to vector<2xf32>
    %252 = vector.shape_cast %251 : vector<2xf32> to vector<2x1xf32>
    %253 = vector.broadcast %252 : vector<2x1xf32> to vector<2x128xf32>
    %254 = arith.cmpf oeq, %250, %253 : vector<2x128xf32>
    %255 = arith.andi %254, %248 : vector<2x128xi1>
    %c128_i32 = arith.constant 128 : i32
    %256 = vector.broadcast %c128_i32 : i32 to vector<2x128xi32>
    %257 = arith.select %255, %246, %256 : vector<2x128xi1>, vector<2x128xi32>
    %cst_104 = arith.constant dense<2147483647> : vector<2xi32>
    %258 = vector.multi_reduction <minsi>, %257, %cst_104 [1] : vector<2x128xi32> to vector<2xi32>
    %259 = vector.shape_cast %258 : vector<2xi32> to vector<2x1xi32>
    %c0_105 = arith.constant 0 : index
    %c0_106 = arith.constant 0 : index
    %260 = vector.load %arg10[%c0_105, %c0_106] : memref<2x1xi32, #tpu.memory_space<vmem>>, vector<2x1xi32>
    tpu.vector_store %arg10[%c0_105, %c0_106], %259 {strides = array<i32>} : memref<2x1xi32, #tpu.memory_space<vmem>>, vector<2x1xi32>,
    return
  }
  func.func @transform_0(%arg0: i32, %arg1: memref<2x8xi32, #tpu.memory_space<smem>>) -> (i32, i32) {
    %c0_i32 = arith.constant 0 : i32
    %c0_i32_0 = arith.constant 0 : i32
    %c0_i32_1 = arith.constant 0 : i32
    return %c0_i32, %c0_i32_0 : i32, i32
  }
  func.func @transform_1(%arg0: i32, %arg1: memref<2x8xi32, #tpu.memory_space<smem>>) -> (i32, i32) {
    %c0_i32 = arith.constant 0 : i32
    %c0_i32_0 = arith.constant 0 : i32
    %c0_i32_1 = arith.constant 0 : i32
    return %c0_i32, %c0_i32_0 : i32, i32
  }
  func.func @transform_2(%arg0: i32, %arg1: memref<2x8xi32, #tpu.memory_space<smem>>) -> (i32, i32) {
    %c0_i32 = arith.constant 0 : i32
    %c0_i32_0 = arith.constant 0 : i32
    %c0_i32_1 = arith.constant 0 : i32
    return %c0_i32, %c0_i32_0 : i32, i32
  }
  func.func @transform_3(%arg0: i32, %arg1: memref<2x8xi32, #tpu.memory_space<smem>>) -> (i32, i32) {
    %c0_i32 = arith.constant 0 : i32
    %c0_i32_0 = arith.constant 0 : i32
    %c0_i32_1 = arith.constant 0 : i32
    return %c0_i32, %c0_i32_0 : i32, i32
  }
  func.func @transform_4(%arg0: i32, %arg1: memref<2x8xi32, #tpu.memory_space<smem>>) -> (i32, i32) {
    %c0_i32 = arith.constant 0 : i32
    %c0_i32_0 = arith.constant 0 : i32
    %c0_i32_1 = arith.constant 0 : i32
    return %c0_i32, %c0_i32_0 : i32, i32
  }
  func.func @transform_5(%arg0: i32, %arg1: memref<2x8xi32, #tpu.memory_space<smem>>) -> (i32, i32) {
    %c0_i32 = arith.constant 0 : i32
    %c0_i32_0 = arith.constant 0 : i32
    %c0_i32_1 = arith.constant 0 : i32
    return %c0_i32, %c0_i32_0 : i32, i32
  }
  func.func @transform_6(%arg0: i32, %arg1: memref<2x8xi32, #tpu.memory_space<smem>>) -> (i32, i32) {
    %c0_i32 = arith.constant 0 : i32
    %c0_i32_0 = arith.constant 0 : i32
    %c0_i32_1 = arith.constant 0 : i32
    return %c0_i32, %c0_i32_0 : i32, i32
  }
  func.func @transform_7(%arg0: i32, %arg1: memref<2x8xi32, #tpu.memory_space<smem>>) -> (i32, i32) {
    %c0_i32 = arith.constant 0 : i32
    %c0_i32_0 = arith.constant 0 : i32
    %c0_i32_1 = arith.constant 0 : i32
    return %c0_i32, %c0_i32_0 : i32, i32
  }
  func.func @transform_8(%arg0: i32, %arg1: memref<2x8xi32, #tpu.memory_space<smem>>) -> (i32, i32) {
    %c0_i32 = arith.constant 0 : i32
    %c0_i32_0 = arith.constant 0 : i32
    %c0_i32_1 = arith.constant 0 : i32
    return %c0_i32, %c0_i32_0 : i32, i32
  }
}

</mosaic_0001>

<llo_original>
// kernel: lstm_text_cls_forward.1
$region0: #{lstm_text_cls_forward.1}
  #allocation0 [shape = 'u32[]', space=smem, size = 0x4, offset = 0x4, fixed_abs, tag = 'smem constant byte address 0x4 - core index']
  #allocation1 [shape = 'u32[144,128]{1,0:T(1,128)}', space=vmem, size = 0x12000, scoped, tag = 'internal scratch']
  #allocation2 [shape = 's32[1]{0}', space=sflag, size = 0x4, scoped, tag = 'scoped memory for lstm_text_cls_forward.1']
  #allocation3 [shape = 'u8[1024]{0}', space=smem, size = 0x400, scoped, tag = 'prefetched SMEM operand 0']
  %s0 = inlined_call_operand.vmem [shape: s32[2,8], index: 0, kind: input, shape index: {}]
  %s1 = inlined_call_operand.vmem [shape: f32[50,16], index: 1, kind: input, shape index: {}]
  %s2 = inlined_call_operand.vmem [shape: f32[16,128], index: 2, kind: input, shape index: {}]
  %s3 = inlined_call_operand.vmem [shape: f32[32,128], index: 3, kind: input, shape index: {}]
  %s4 = inlined_call_operand.vmem [shape: f32[1,128], index: 4, kind: input, shape index: {}]
  %s5 = inlined_call_operand.hbm [shape: f32[256,128], index: 5, kind: input, shape index: {}]
  %s6 = inlined_call_operand.vmem [shape: f32[1,128], index: 6, kind: input, shape index: {}]
  %s7 = inlined_call_operand.vmem [shape: f32[2,256], index: 7, kind: output, shape index: {0}]
  %s8 = inlined_call_operand.hbm [shape: f32[2,128], index: 8, kind: output, shape index: {1}]
  %s9 = inlined_call_operand.vmem [shape: s32[2,1], index: 9, kind: output, shape index: {2}]
  %10 = xla_tuple %s7, %s8, %s9
  %s11 = sld [smem:[#allocation0]]
  $region54: #{lstm_text_cls_forward.1} parent=0
    _
  %s13 = ssub.s32 1, %s11
  %s14 = scalar_select 0, %s13, %s11
  %s15 = sshll.u32 %s0, 4
  %s16 = int_to_ptr.vmem [resolvable:$true] %s15
  %18 = dma.vmem_to_smem %s16, 32, [#allocation3], [#allocation2]
  %19 = dma.done [#allocation2], 32
  %20 = sfence
  $region1: #{lstm_text_cls_forward.1} parent=0
    #allocation4 [shape = 'u8[131072]{0}', space=vmem, size = 0x20000, scoped, tag = 'input window, operand 5, single buffered']
    #allocation5 [shape = 's32[1]{0}', space=sflag, size = 0x4, scoped, tag = 'scoped memory for lstm_text_cls_forward.1']
    #allocation6 [shape = 's32[1]{0}', space=sflag, size = 0x4, scoped, tag = 'scoped memory for lstm_text_cls_forward.1']
    #allocation7 [shape = 'u8[1024]{0}', space=vmem, size = 0x400, scoped, tag = 'output window, operand 1, single buffered']
    %21 = vsyncpa [#allocation5], 0
    %22 = vsyncpa [#allocation6], 0
    // Predicated region
    $region2: #{lstm_text_cls_forward.1} parent=1 // pred_check
      _
    $region3: #{lstm_text_cls_forward.1} parent=1 // pred_check_branch
      %24 = sbr.rel (0) target = $region5
    $region4: #{lstm_text_cls_forward.1} parent=1 // pred_region
      _
    $region5: #{lstm_text_cls_forward.1} parent=1 // pred_fallthru
      _
    // Predicated region
    $region6: #{lstm_text_cls_forward.1} parent=1 // pred_check
      _
    $region7: #{lstm_text_cls_forward.1} parent=1 // pred_check_branch
      %26 = sbr.rel (0) target = $region9
    $region8: #{lstm_text_cls_forward.1} parent=1 // pred_region
      _
    $region9: #{lstm_text_cls_forward.1} parent=1 // pred_fallthru
      _
    // Predicated region
    $region10: #{lstm_text_cls_forward.1} parent=1 // pred_check
      _
    $region11: #{lstm_text_cls_forward.1} parent=1 // pred_check_branch
      %28 = sbr.rel (0) target = $region13
    $region12: #{lstm_text_cls_forward.1} parent=1 // pred_region
      _
    $region13: #{lstm_text_cls_forward.1} parent=1 // pred_fallthru
      _
    // Predicated region
    $region14: #{lstm_text_cls_forward.1} parent=1 // pred_check
      _
    $region15: #{lstm_text_cls_forward.1} parent=1 // pred_check_branch
      %30 = sbr.rel (0) target = $region17
    $region16: #{lstm_text_cls_forward.1} parent=1 // pred_region
      _
    $region17: #{lstm_text_cls_forward.1} parent=1 // pred_fallthru
      _
    // Predicated region
    $region18: #{lstm_text_cls_forward.1} parent=1 // pred_check
      _
    $region19: #{lstm_text_cls_forward.1} parent=1 // pred_check_branch
      %32 = sbr.rel (0) target = $region21
    $region20: #{lstm_text_cls_forward.1} parent=1 // pred_region
      %s34 = ssub.s32 4096, 4096
      %35 = vsyncadd [#allocation5], %s34
      %s36 = sshll.u32 [#allocation4], 4
      %s37 = int_to_ptr.vmem [resolvable:$true] %s36
      %42 = dma.hbm_to_vmem [thread:$0]  %s5, 4096, %s37, [#allocation5], 128, 128, 8
    $region21: #{lstm_text_cls_forward.1} parent=1 // pred_fallthru
      _
    // Predicated region
    $region22: #{lstm_text_cls_forward.1} parent=1 // pred_check
      _
    $region23: #{lstm_text_cls_forward.1} parent=1 // pred_check_branch
      %44 = sbr.rel (0) target = $region25
    $region24: #{lstm_text_cls_forward.1} parent=1 // pred_region
      _
    $region25: #{lstm_text_cls_forward.1} parent=1 // pred_fallthru
      _
    // Predicated region
    $region26: #{lstm_text_cls_forward.1} parent=1 // pred_check
      _
    $region27: #{lstm_text_cls_forward.1} parent=1 // pred_check_branch
      %46 = sbr.rel (0) target = $region29
    $region28: #{lstm_text_cls_forward.1} parent=1 // pred_region
      %47 = dma.done [#allocation5], 4096
    $region29: #{lstm_text_cls_forward.1} parent=1 // pred_fallthru
      _
    %s48 = sld [smem:[#allocation3]]
    %s49 = scalar_lea.vmem %s1, %s48
    %v50 = vld [vmem:[%s49] sm:$0x1]
    %s51 = sld [smem:[#allocation3 + $0x80]]
    %s52 = scalar_lea.vmem %s1, %s51
    %v53 = vld [vmem:[%s52] sm:$0x1]
    %s54 = sld [smem:[#allocation3 + $0x1]]
    %s55 = scalar_lea.vmem %s1, %s54
    %v56 = vld [vmem:[%s55] sm:$0x1]
    %s57 = sld [smem:[#allocation3 + $0x81]]
    %s58 = scalar_lea.vmem %s1, %s57
    %v59 = vld [vmem:[%s58] sm:$0x1]
    %s60 = sld [smem:[#allocation3 + $0x2]]
    %s61 = scalar_lea.vmem %s1, %s60
    %v62 = vld [vmem:[%s61] sm:$0x1]
    %s63 = sld [smem:[#allocation3 + $0x82]]
    %s64 = scalar_lea.vmem %s1, %s63
    %v65 = vld [vmem:[%s64] sm:$0x1]
    %s66 = sld [smem:[#allocation3 + $0x3]]
    %s67 = scalar_lea.vmem %s1, %s66
    %v68 = vld [vmem:[%s67] sm:$0x1]
    %s69 = sld [smem:[#allocation3 + $0x83]]
    %s70 = scalar_lea.vmem %s1, %s69
    %v71 = vld [vmem:[%s70] sm:$0x1]
    %s72 = sld [smem:[#allocation3 + $0x4]]
    %s73 = scalar_lea.vmem %s1, %s72
    %v74 = vld [vmem:[%s73] sm:$0x1]
    %s75 = sld [smem:[#allocation3 + $0x84]]
    %s76 = scalar_lea.vmem %s1, %s75
    %v77 = vld [vmem:[%s76] sm:$0x1]
    %s78 = sld [smem:[#allocation3 + $0x5]]
    %s79 = scalar_lea.vmem %s1, %s78
    %v80 = vld [vmem:[%s79] sm:$0x1]
    %s81 = sld [smem:[#allocation3 + $0x85]]
    %s82 = scalar_lea.vmem %s1, %s81
    %v83 = vld [vmem:[%s82] sm:$0x1]
    %s84 = sld [smem:[#allocation3 + $0x6]]
    %s85 = scalar_lea.vmem %s1, %s84
    %v86 = vld [vmem:[%s85] sm:$0x1]
    %s87 = sld [smem:[#allocation3 + $0x86]]
    %s88 = scalar_lea.vmem %s1, %s87
    %v89 = vld [vmem:[%s88] sm:$0x1]
    %s90 = sld [smem:[#allocation3 + $0x7]]
    %s91 = scalar_lea.vmem %s1, %s90
    %v92 = vld [vmem:[%s91] sm:$0x1]
    %s93 = sld [smem:[#allocation3 + $0x87]]
    %s94 = scalar_lea.vmem %s1, %s93
    %v95 = vld [vmem:[%s94] sm:$0x1]
    %v97 = vrot.slane %v53, 7
    %v100 = vrot.slane %v56, 6
    %v103 = vrot.slane %v59, 5
    %v106 = vrot.slane %v62, 4
    %v109 = vrot.slane %v65, 3
    %v112 = vrot.slane %v68, 2
    %v115 = vrot.slane %v71, 1
    %v118 = vrot.slane %v77, 7
    %v121 = vrot.slane %v80, 6
    %v124 = vrot.slane %v83, 5
    %v127 = vrot.slane %v86, 4
    %v130 = vrot.slane %v89, 3
    %v133 = vrot.slane %v92, 2
    %v136 = vrot.slane %v95, 1
    %vm138 = vcmask 1040384
    %v139 = vsel %vm138, %v50, %v97
    %vm140 = vcmask 1041408
    %v141 = vsel %vm140, %v139, %v100
    %vm142 = vcmask 1042432
    %v143 = vsel %vm142, %v141, %v103
    %vm144 = vcmask 1043456
    %v145 = vsel %vm144, %v143, %v106
    %vm146 = vcmask 1044480
    %v147 = vsel %vm146, %v145, %v109
    %vm148 = vcmask 1045504
    %v149 = vsel %vm148, %v147, %v112
    %vm150 = vcmask 1046528
    %v151 = vsel %vm150, %v149, %v115
    %v152 = vsel %vm138, %v74, %v118
    %v153 = vsel %vm140, %v152, %v121
    %v154 = vsel %vm142, %v153, %v124
    %v155 = vsel %vm144, %v154, %v127
    %v156 = vsel %vm146, %v155, %v130
    %v157 = vsel %vm148, %v156, %v133
    %v158 = vsel %vm150, %v157, %v136
    %v159 = vld [vmem:[%s2] sm:$0xff]
    %v160 = vld [vmem:[%s2 + $0x8] sm:$0xff]
    %v161 = vld [vmem:[%s4] sm:$0x1]
    %v163 = vlaneseq
    %v164 = vshrl.u32 %v163, 7
    %v165 = vsub.s32 0, %v164
    %v166 = vrot.slane %v161, %v165
    %vm168 = vcmask 130048
    %v170 = vsel %vm168, %v151, 0
    %v173 = vsel %vm168, %v158, 0
    %175 = vmatprep.subr.mxu0 0.0
    %176 = vmatpush1.msra.mxu0 0.0
    %177 = vmatprep.subr.mxu0 0.0
    %178 = vmatpush1.msra.mxu0 0.0
    %179 = vmatprep.subr.mxu0 0.0
    %180 = vmatpush1.msra.mxu0 0.0
    %181 = vmatprep.subr.mxu0 0.0
    %182 = vmatpush1.msra.mxu0 0.0
    %183 = vmatprep.subr.mxu0 0.0
    %184 = vmatpush1.msra.mxu0 0.0
    %185 = vmatprep.subr.mxu0 0.0
    %186 = vmatpush1.msra.mxu0 0.0
    %187 = vmatprep.subr.mxu0 0.0
    %188 = vmatpush1.msra.mxu0 0.0
    %189 = vmatprep.subr.mxu0 0.0
    %190 = vmatpush1.msra.mxu0 0.0
    %191 = vmatprep.subr.mxu0 0.0
    %192 = vmatpush1.msra.mxu0 0.0
    %193 = vmatprep.subr.mxu0 0.0
    %194 = vmatpush1.msra.mxu0 0.0
    %195 = vmatprep.subr.mxu0 0.0
    %196 = vmatpush1.msra.mxu0 0.0
    %197 = vmatprep.subr.mxu0 0.0
    %198 = vmatpush1.msra.mxu0 0.0
    %199 = vmatprep.subr.mxu0 0.0
    %200 = vmatpush1.msra.mxu0 0.0
    %201 = vmatprep.subr.mxu0 0.0
    %202 = vmatpush1.msra.mxu0 0.0
    %203 = vmatprep.subr.mxu0 0.0
    %204 = vmatpush1.msra.mxu0 %v160
    %205 = vmatprep.subr.mxu0 0.0
    %206 = vmatpush1.msra.mxu0 %v159
    %207 = vmatprep.subr.mxu0 0.0
    %208 = vmatpush2.msra.mxu0 0.0
    %209 = vmatprep.subr.mxu0 0.0
    %210 = vmatpush2.msra.mxu0 0.0
    %211 = vmatprep.subr.mxu0 0.0
    %212 = vmatpush2.msra.mxu0 0.0
    %213 = vmatprep.subr.mxu0 0.0
    %214 = vmatpush2.msra.mxu0 0.0
    %215 = vmatprep.subr.mxu0 0.0
    %216 = vmatpush2.msra.mxu0 0.0
    %217 = vmatprep.subr.mxu0 0.0
    %218 = vmatpush2.msra.mxu0 0.0
    %219 = vmatprep.subr.mxu0 0.0
    %220 = vmatpush2.msra.mxu0 0.0
    %221 = vmatprep.subr.mxu0 0.0
    %222 = vmatpush2.msra.mxu0 0.0
    %223 = vmatprep.subr.mxu0 0.0
    %224 = vmatpush2.msra.mxu0 0.0
    %225 = vmatprep.subr.mxu0 0.0
    %226 = vmatpush2.msra.mxu0 0.0
    %227 = vmatprep.subr.mxu0 0.0
    %228 = vmatpush2.msra.mxu0 0.0
    %229 = vmatprep.subr.mxu0 0.0
    %230 = vmatpush2.msra.mxu0 0.0
    %231 = vmatprep.subr.mxu0 0.0
    %232 = vmatpush2.msra.mxu0 0.0
    %233 = vmatprep.subr.mxu0 0.0
    %234 = vmatpush2.msra.mxu0 0.0
    %235 = vmatprep.subr.mxu0 0.0
    %236 = vmatpush2.msra.mxu0 0.0
    %237 = vmatprep.subr.mxu0 0.0
    %238 = vmatpush2.msra.mxu0 0.0
    %239 = vmatprep.mubr.f32.mxu0 0.0
    %240 = vmatmul.mubr.f32.gmra.mxu0 %v170
    %v241 = vpop.f32.mrf.mxu0
    %v242 = vadd.f32 %v166, %v241
    %v243 = vpop.f32.mrf.mxu0
    %244 = vmatprep.mubr.f32.mxu0 0.0
    %245 = vmatmul.mubr.f32.gmra.mxu0 %v173
    %v246 = vpop.f32.mrf.mxu0
    %v247 = vadd.f32 %v166, %v246
    %v248 = vpop.f32.mrf.mxu0
    %249 = vdwg.mxu0
    %v250 = vld [vmem:[%s3] sm:$0xff]
    %v251 = vld [vmem:[%s3 + $0x8] sm:$0xff]
    %v252 = vld [vmem:[%s3 + $0x10] sm:$0xff]
    %v253 = vld [vmem:[%s3 + $0x18] sm:$0xff]
    %v254 = vld [vmem:[%s6] sm:$0x1]
    %v256 = vlaneseq
    %v257 = vshrl.u32 %v256, 7
    %v258 = vsub.s32 0, %v257
    %v259 = vrot.slane %v254, %v258
    %v261 = vadd.f32 %v259, 0.0
    %vm262 = vcmask 261120
    %v264 = vsel %vm262, 0.0, 0
    %266 = vmatprep.subr.mxu0 0.0
    %267 = vmatpush1.msra.mxu0 0.0
    %268 = vmatprep.subr.mxu0 0.0
    %269 = vmatpush1.msra.mxu0 0.0
    %270 = vmatprep.subr.mxu0 0.0
    %271 = vmatpush1.msra.mxu0 0.0
    %272 = vmatprep.subr.mxu0 0.0
    %273 = vmatpush1.msra.mxu0 0.0
    %274 = vmatprep.subr.mxu0 0.0
    %275 = vmatpush1.msra.mxu0 0.0
    %276 = vmatprep.subr.mxu0 0.0
    %277 = vmatpush1.msra.mxu0 0.0
    %278 = vmatprep.subr.mxu0 0.0
    %279 = vmatpush1.msra.mxu0 0.0
    %280 = vmatprep.subr.mxu0 0.0
    %281 = vmatpush1.msra.mxu0 0.0
    %282 = vmatprep.subr.mxu0 0.0
    %283 = vmatpush1.msra.mxu0 0.0
    %284 = vmatprep.subr.mxu0 0.0
    %285 = vmatpush1.msra.mxu0 0.0
    %286 = vmatprep.subr.mxu0 0.0
    %287 = vmatpush1.msra.mxu0 0.0
    %288 = vmatprep.subr.mxu0 0.0
    %289 = vmatpush1.msra.mxu0 0.0
    %290 = vmatprep.subr.mxu0 0.0
    %291 = vmatpush1.msra.mxu0 %v253
    %292 = vmatprep.subr.mxu0 0.0
    %293 = vmatpush1.msra.mxu0 %v252
    %294 = vmatprep.subr.mxu0 0.0
    %295 = vmatpush1.msra.mxu0 %v251
    %296 = vmatprep.subr.mxu0 0.0
    %297 = vmatpush1.msra.mxu0 %v250
    %298 = vmatprep.subr.mxu0 0.0
    %299 = vmatpush2.msra.mxu0 0.0
    %300 = vmatprep.subr.mxu0 0.0
    %301 = vmatpush2.msra.mxu0 0.0
    %302 = vmatprep.subr.mxu0 0.0
    %303 = vmatpush2.msra.mxu0 0.0
    %304 = vmatprep.subr.mxu0 0.0
    %305 = vmatpush2.msra.mxu0 0.0
    %306 = vmatprep.subr.mxu0 0.0
    %307 = vmatpush2.msra.mxu0 0.0
    %308 = vmatprep.subr.mxu0 0.0
    %309 = vmatpush2.msra.mxu0 0.0
    %310 = vmatprep.subr.mxu0 0.0
    %311 = vmatpush2.msra.mxu0 0.0
    %312 = vmatprep.subr.mxu0 0.0
    %313 = vmatpush2.msra.mxu0 0.0
    %314 = vmatprep.subr.mxu0 0.0
    %315 = vmatpush2.msra.mxu0 0.0
    %316 = vmatprep.subr.mxu0 0.0
    %317 = vmatpush2.msra.mxu0 0.0
    %318 = vmatprep.subr.mxu0 0.0
    %319 = vmatpush2.msra.mxu0 0.0
    %320 = vmatprep.subr.mxu0 0.0
    %321 = vmatpush2.msra.mxu0 0.0
    %322 = vmatprep.subr.mxu0 0.0
    %323 = vmatpush2.msra.mxu0 0.0
    %324 = vmatprep.subr.mxu0 0.0
    %325 = vmatpush2.msra.mxu0 0.0
    %326 = vmatprep.subr.mxu0 0.0
    %327 = vmatpush2.msra.mxu0 0.0
    %328 = vmatprep.subr.mxu0 0.0
    %329 = vmatpush2.msra.mxu0 0.0
    %330 = vmatprep.mubr.f32.mxu0 0.0
    %331 = vmatmul.mubr.f32.gmra.mxu0 %v264
    %v332 = vpop.f32.mrf.mxu0
    %v333 = vadd.f32 0.0, %v332
    %v334 = vpop.f32.mrf.mxu0
    %335 = vdwg.mxu0
    %v336 = vadd.f32 %v242, %v333
    %v337 = vxor.u32 %v336, 2147483648
    %v338 = vmul.f32 %v337, 1.442695
    %v339 = vpow.pop %v338
    %v340 = vadd.f32 %v339, 1.0
    %v341 = vrcp.pop %v340
    %v342 = vmul.f32 1.0, %v341
    %v343 = vtanh.pop %v336
    %v344 = vmul.f32 %v342, 0.0
    %346 = vrot.lane.b32.xlu0 %v343, 64
    %v347 = vpop.permute.xlu0 %346
    %v349 = vmul.f32 %v342, %v347
    %351 = vrot.lane.b32.xlu0 %v349, 96
    %v352 = vpop.permute.xlu0 %351
    %v354 = vadd.f32 %v344, %v352
    %v355 = vtanh.pop %v354
    %357 = vrot.lane.b32.xlu0 %v355, 64
    %v358 = vpop.permute.xlu0 %357
    %v360 = vmul.f32 %v342, %v358
    %v363 = vunpack.c.l.s4 1983009808
    %v364 = vunpack.c.0.s8 %v363
    %v365 = vlaneseq
    %v366 = vshrl.u32 %v365, 7
    %v367 = vsub.s32 %v364, %v366
    %v368 = vrot.slane %v360, %v367
    %369 = vrot.lane.b32.xlu0 %v368, 64
    %v370 = vpop.permute.xlu0 %369
    %vm372 = vcmask 254976
    %373 = vst.msk [vmem:[%s7] sm:$0x3] %vm372, %v370
    %v374 = vld [vmem:[#allocation4] sm:$0xff]
    %v375 = vld [vmem:[#allocation4 + $0x8] sm:$0xff]
    %v376 = vld [vmem:[#allocation4 + $0x10] sm:$0xff]
    %v377 = vld [vmem:[#allocation4 + $0x18] sm:$0xff]
    %378 = vrot.lane.b32.xlu0 %v360, 64
    %v379 = vpop.permute.xlu0 %378
    %v380 = vsel %vm262, %v379, 0
    %382 = vmatprep.subr.mxu0 0.0
    %383 = vmatpush1.msra.mxu0 0.0
    %384 = vmatprep.subr.mxu0 0.0
    %385 = vmatpush1.msra.mxu0 0.0
    %386 = vmatprep.subr.mxu0 0.0
    %387 = vmatpush1.msra.mxu0 0.0
    %388 = vmatprep.subr.mxu0 0.0
    %389 = vmatpush1.msra.mxu0 0.0
    %390 = vmatprep.subr.mxu0 0.0
    %391 = vmatpush1.msra.mxu0 0.0
    %392 = vmatprep.subr.mxu0 0.0
    %393 = vmatpush1.msra.mxu0 0.0
    %394 = vmatprep.subr.mxu0 0.0
    %395 = vmatpush1.msra.mxu0 0.0
    %396 = vmatprep.subr.mxu0 0.0
    %397 = vmatpush1.msra.mxu0 0.0
    %398 = vmatprep.subr.mxu0 0.0
    %399 = vmatpush1.msra.mxu0 0.0
    %400 = vmatprep.subr.mxu0 0.0
    %401 = vmatpush1.msra.mxu0 0.0
    %402 = vmatprep.subr.mxu0 0.0
    %403 = vmatpush1.msra.mxu0 0.0
    %404 = vmatprep.subr.mxu0 0.0
    %405 = vmatpush1.msra.mxu0 0.0
    %406 = vmatprep.subr.mxu0 0.0
    %407 = vmatpush1.msra.mxu0 %v377
    %408 = vmatprep.subr.mxu0 0.0
    %409 = vmatpush1.msra.mxu0 %v376
    %410 = vmatprep.subr.mxu0 0.0
    %411 = vmatpush1.msra.mxu0 %v375
    %412 = vmatprep.subr.mxu0 0.0
    %413 = vmatpush1.msra.mxu0 %v374
    %414 = vmatprep.subr.mxu0 0.0
    %415 = vmatpush2.msra.mxu0 0.0
    %416 = vmatprep.subr.mxu0 0.0
    %417 = vmatpush2.msra.mxu0 0.0
    %418 = vmatprep.subr.mxu0 0.0
    %419 = vmatpush2.msra.mxu0 0.0
    %420 = vmatprep.subr.mxu0 0.0
    %421 = vmatpush2.msra.mxu0 0.0
    %422 = vmatprep.subr.mxu0 0.0
    %423 = vmatpush2.msra.mxu0 0.0
    %424 = vmatprep.subr.mxu0 0.0
    %425 = vmatpush2.msra.mxu0 0.0
    %426 = vmatprep.subr.mxu0 0.0
    %427 = vmatpush2.msra.mxu0 0.0
    %428 = vmatprep.subr.mxu0 0.0
    %429 = vmatpush2.msra.mxu0 0.0
    %430 = vmatprep.subr.mxu0 0.0
    %431 = vmatpush2.msra.mxu0 0.0
    %432 = vmatprep.subr.mxu0 0.0
    %433 = vmatpush2.msra.mxu0 0.0
    %434 = vmatprep.subr.mxu0 0.0
    %435 = vmatpush2.msra.mxu0 0.0
    %436 = vmatprep.subr.mxu0 0.0
    %437 = vmatpush2.msra.mxu0 0.0
    %438 = vmatprep.subr.mxu0 0.0
    %439 = vmatpush2.msra.mxu0 0.0
    %440 = vmatprep.subr.mxu0 0.0
    %441 = vmatpush2.msra.mxu0 0.0
    %442 = vmatprep.subr.mxu0 0.0
    %443 = vmatpush2.msra.mxu0 0.0
    %444 = vmatprep.subr.mxu0 0.0
    %445 = vmatpush2.msra.mxu0 0.0
    %446 = vmatprep.mubr.f32.mxu0 0.0
    %447 = vmatmul.mubr.f32.gmra.mxu0 %v380
    %v448 = vpop.f32.mrf.mxu0
    %v449 = vadd.f32 0.0, %v448
    %v450 = vpop.f32.mrf.mxu0
    %451 = vdwg.mxu0
    %v452 = vadd.f32 %v261, %v449
    %453 = vmatprep.subr.mxu0 0.0
    %454 = vmatpush1.msra.mxu0 0.0
    %455 = vmatprep.subr.mxu0 0.0
    %456 = vmatpush1.msra.mxu0 0.0
    %457 = vmatprep.subr.mxu0 0.0
    %458 = vmatpush1.msra.mxu0 0.0
    %459 = vmatprep.subr.mxu0 0.0
    %460 = vmatpush1.msra.mxu0 0.0
    %461 = vmatprep.subr.mxu0 0.0
    %462 = vmatpush1.msra.mxu0 0.0
    %463 = vmatprep.subr.mxu0 0.0
    %464 = vmatpush1.msra.mxu0 0.0
    %465 = vmatprep.subr.mxu0 0.0
    %466 = vmatpush1.msra.mxu0 0.0
    %467 = vmatprep.subr.mxu0 0.0
    %468 = vmatpush1.msra.mxu0 0.0
    %469 = vmatprep.subr.mxu0 0.0
    %470 = vmatpush1.msra.mxu0 0.0
    %471 = vmatprep.subr.mxu0 0.0
    %472 = vmatpush1.msra.mxu0 0.0
    %473 = vmatprep.subr.mxu0 0.0
    %474 = vmatpush1.msra.mxu0 0.0
    %475 = vmatprep.subr.mxu0 0.0
    %476 = vmatpush1.msra.mxu0 0.0
    %477 = vmatprep.subr.mxu0 0.0
    %478 = vmatpush1.msra.mxu0 %v253
    %479 = vmatprep.subr.mxu0 0.0
    %480 = vmatpush1.msra.mxu0 %v252
    %481 = vmatprep.subr.mxu0 0.0
    %482 = vmatpush1.msra.mxu0 %v251
    %483 = vmatprep.subr.mxu0 0.0
    %484 = vmatpush1.msra.mxu0 %v250
    %485 = vmatprep.subr.mxu0 0.0
    %486 = vmatpush2.msra.mxu0 0.0
    %487 = vmatprep.subr.mxu0 0.0
    %488 = vmatpush2.msra.mxu0 0.0
    %489 = vmatprep.subr.mxu0 0.0
    %490 = vmatpush2.msra.mxu0 0.0
    %491 = vmatprep.subr.mxu0 0.0
    %492 = vmatpush2.msra.mxu0 0.0
    %493 = vmatprep.subr.mxu0 0.0
    %494 = vmatpush2.msra.mxu0 0.0
    %495 = vmatprep.subr.mxu0 0.0
    %496 = vmatpush2.msra.mxu0 0.0
    %497 = vmatprep.subr.mxu0 0.0
    %498 = vmatpush2.msra.mxu0 0.0
    %499 = vmatprep.subr.mxu0 0.0
    %500 = vmatpush2.msra.mxu0 0.0
    %501 = vmatprep.subr.mxu0 0.0
    %502 = vmatpush2.msra.mxu0 0.0
    %503 = vmatprep.subr.mxu0 0.0
    %504 = vmatpush2.msra.mxu0 0.0
    %505 = vmatprep.subr.mxu0 0.0
    %506 = vmatpush2.msra.mxu0 0.0
    %507 = vmatprep.subr.mxu0 0.0
    %508 = vmatpush2.msra.mxu0 0.0
    %509 = vmatprep.subr.mxu0 0.0
    %510 = vmatpush2.msra.mxu0 0.0
    %511 = vmatprep.subr.mxu0 0.0
    %512 = vmatpush2.msra.mxu0 0.0
    %513 = vmatprep.subr.mxu0 0.0
    %514 = vmatpush2.msra.mxu0 0.0
    %515 = vmatprep.subr.mxu0 0.0
    %516 = vmatpush2.msra.mxu0 0.0
    %517 = vmatprep.mubr.f32.mxu0 0.0
    %518 = vmatmul.mubr.f32.gmra.mxu0 %v380
    %v519 = vpop.f32.mrf.mxu0
    %v520 = vadd.f32 0.0, %v519
    %v521 = vpop.f32.mrf.mxu0
    %522 = vdwg.mxu0
    %v524 = vrot.slane %v520, 6
    %v526 = vadd.f32 %v242, %v524
    %v527 = vxor.u32 %v526, 2147483648
    %v528 = vmul.f32 %v527, 1.442695
    %v529 = vpow.pop %v528
    %v530 = vadd.f32 %v529, 1.0
    %v531 = vrcp.pop %v530
    %v532 = vmul.f32 1.0, %v531
    %v533 = vtanh.pop %v526
    %v535 = vrot.slane %v354, 6
    %v537 = vmul.f32 %v532, %v535
    %539 = vrot.lane.b32.xlu0 %v533, 64
    %v540 = vpop.permute.xlu0 %539
    %v542 = vmul.f32 %v532, %v540
    %544 = vrot.lane.b32.xlu0 %v542, 96
    %v545 = vpop.permute.xlu0 %544
    %v547 = vadd.f32 %v537, %v545
    %v548 = vtanh.pop %v547
    %550 = vrot.lane.b32.xlu0 %v548, 64
    %v551 = vpop.permute.xlu0 %550
    %v553 = vmul.f32 %v532, %v551
    %v556 = vunpack.c.l.s4 1983009808
    %v557 = vunpack.c.0.s8 %v556
    %v558 = vlaneseq
    %v559 = vshrl.u32 %v558, 7
    %v560 = vsub.s32 %v557, %v559
    %v561 = vrot.slane %v553, %v560
    %v562 = vcombine.high %v561, %v561
    %563 = vrot.lane.b32.xlu0 %v562, 96
    %v564 = vpop.permute.xlu0 %563
    %vm566 = vcmask 517376
    %567 = vst.msk [vmem:[%s7] sm:$0x3] %vm566, %v564
    %v568 = vld [vmem:[#allocation4 + $0x20] sm:$0xff]
    %v569 = vld [vmem:[#allocation4 + $0x28] sm:$0xff]
    %v570 = vld [vmem:[#allocation4 + $0x30] sm:$0xff]
    %v571 = vld [vmem:[#allocation4 + $0x38] sm:$0xff]
    %v572 = vrot.slane %v553, 2
    %573 = vrot.lane.b32.xlu0 %v572, 64
    %v574 = vpop.permute.xlu0 %573
    %v575 = vsel %vm262, %v574, 0
    %577 = vmatprep.subr.mxu0 0.0
    %578 = vmatpush1.msra.mxu0 0.0
    %579 = vmatprep.subr.mxu0 0.0
    %580 = vmatpush1.msra.mxu0 0.0
    %581 = vmatprep.subr.mxu0 0.0
    %582 = vmatpush1.msra.mxu0 0.0
    %583 = vmatprep.subr.mxu0 0.0
    %584 = vmatpush1.msra.mxu0 0.0
    %585 = vmatprep.subr.mxu0 0.0
    %586 = vmatpush1.msra.mxu0 0.0
    %587 = vmatprep.subr.mxu0 0.0
    %588 = vmatpush1.msra.mxu0 0.0
    %589 = vmatprep.subr.mxu0 0.0
    %590 = vmatpush1.msra.mxu0 0.0
    %591 = vmatprep.subr.mxu0 0.0
    %592 = vmatpush1.msra.mxu0 0.0
    %593 = vmatprep.subr.mxu0 0.0
    %594 = vmatpush1.msra.mxu0 0.0
    %595 = vmatprep.subr.mxu0 0.0
    %596 = vmatpush1.msra.mxu0 0.0
    %597 = vmatprep.subr.mxu0 0.0
    %598 = vmatpush1.msra.mxu0 0.0
    %599 = vmatprep.subr.mxu0 0.0
    %600 = vmatpush1.msra.mxu0 0.0
    %601 = vmatprep.subr.mxu0 0.0
    %602 = vmatpush1.msra.mxu0 %v571
    %603 = vmatprep.subr.mxu0 0.0
    %604 = vmatpush1.msra.mxu0 %v570
    %605 = vmatprep.subr.mxu0 0.0
    %606 = vmatpush1.msra.mxu0 %v569
    %607 = vmatprep.subr.mxu0 0.0
    %608 = vmatpush1.msra.mxu0 %v568
    %609 = vmatprep.subr.mxu0 0.0
    %610 = vmatpush2.msra.mxu0 0.0
    %611 = vmatprep.subr.mxu0 0.0
    %612 = vmatpush2.msra.mxu0 0.0
    %613 = vmatprep.subr.mxu0 0.0
    %614 = vmatpush2.msra.mxu0 0.0
    %615 = vmatprep.subr.mxu0 0.0
    %616 = vmatpush2.msra.mxu0 0.0
    %617 = vmatprep.subr.mxu0 0.0
    %618 = vmatpush2.msra.mxu0 0.0
    %619 = vmatprep.subr.mxu0 0.0
    %620 = vmatpush2.msra.mxu0 0.0
    %621 = vmatprep.subr.mxu0 0.0
    %622 = vmatpush2.msra.mxu0 0.0
    %623 = vmatprep.subr.mxu0 0.0
    %624 = vmatpush2.msra.mxu0 0.0
    %625 = vmatprep.subr.mxu0 0.0
    %626 = vmatpush2.msra.mxu0 0.0
    %627 = vmatprep.subr.mxu0 0.0
    %628 = vmatpush2.msra.mxu0 0.0
    %629 = vmatprep.subr.mxu0 0.0
    %630 = vmatpush2.msra.mxu0 0.0
    %631 = vmatprep.subr.mxu0 0.0
    %632 = vmatpush2.msra.mxu0 0.0
    %633 = vmatprep.subr.mxu0 0.0
    %634 = vmatpush2.msra.mxu0 0.0
    %635 = vmatprep.subr.mxu0 0.0
    %636 = vmatpush2.msra.mxu0 0.0
    %637 = vmatprep.subr.mxu0 0.0
    %638 = vmatpush2.msra.mxu0 0.0
    %639 = vmatprep.subr.mxu0 0.0
    %640 = vmatpush2.msra.mxu0 0.0
    %641 = vmatprep.mubr.f32.mxu0 0.0
    %642 = vmatmul.mubr.f32.gmra.mxu0 %v575
    %v643 = vpop.f32.mrf.mxu0
    %v644 = vadd.f32 0.0, %v643
    %v645 = vpop.f32.mrf.mxu0
    %646 = vdwg.mxu0
    %v647 = vadd.f32 %v452, %v644
    %648 = vmatprep.subr.mxu0 0.0
    %649 = vmatpush1.msra.mxu0 0.0
    %650 = vmatprep.subr.mxu0 0.0
    %651 = vmatpush1.msra.mxu0 0.0
    %652 = vmatprep.subr.mxu0 0.0
    %653 = vmatpush1.msra.mxu0 0.0
    %654 = vmatprep.subr.mxu0 0.0
    %655 = vmatpush1.msra.mxu0 0.0
    %656 = vmatprep.subr.mxu0 0.0
    %657 = vmatpush1.msra.mxu0 0.0
    %658 = vmatprep.subr.mxu0 0.0
    %659 = vmatpush1.msra.mxu0 0.0
    %660 = vmatprep.subr.mxu0 0.0
    %661 = vmatpush1.msra.mxu0 0.0
    %662 = vmatprep.subr.mxu0 0.0
    %663 = vmatpush1.msra.mxu0 0.0
    %664 = vmatprep.subr.mxu0 0.0
    %665 = vmatpush1.msra.mxu0 0.0
    %666 = vmatprep.subr.mxu0 0.0
    %667 = vmatpush1.msra.mxu0 0.0
    %668 = vmatprep.subr.mxu0 0.0
    %669 = vmatpush1.msra.mxu0 0.0
    %670 = vmatprep.subr.mxu0 0.0
    %671 = vmatpush1.msra.mxu0 0.0
    %672 = vmatprep.subr.mxu0 0.0
    %673 = vmatpush1.msra.mxu0 %v253
    %674 = vmatprep.subr.mxu0 0.0
    %675 = vmatpush1.msra.mxu0 %v252
    %676 = vmatprep.subr.mxu0 0.0
    %677 = vmatpush1.msra.mxu0 %v251
    %678 = vmatprep.subr.mxu0 0.0
    %679 = vmatpush1.msra.mxu0 %v250
    %680 = vmatprep.subr.mxu0 0.0
    %681 = vmatpush2.msra.mxu0 0.0
    %682 = vmatprep.subr.mxu0 0.0
    %683 = vmatpush2.msra.mxu0 0.0
    %684 = vmatprep.subr.mxu0 0.0
    %685 = vmatpush2.msra.mxu0 0.0
    %686 = vmatprep.subr.mxu0 0.0
    %687 = vmatpush2.msra.mxu0 0.0
    %688 = vmatprep.subr.mxu0 0.0
    %689 = vmatpush2.msra.mxu0 0.0
    %690 = vmatprep.subr.mxu0 0.0
    %691 = vmatpush2.msra.mxu0 0.0
    %692 = vmatprep.subr.mxu0 0.0
    %693 = vmatpush2.msra.mxu0 0.0
    %694 = vmatprep.subr.mxu0 0.0
    %695 = vmatpush2.msra.mxu0 0.0
    %696 = vmatprep.subr.mxu0 0.0
    %697 = vmatpush2.msra.mxu0 0.0
    %698 = vmatprep.subr.mxu0 0.0
    %699 = vmatpush2.msra.mxu0 0.0
    %700 = vmatprep.subr.mxu0 0.0
    %701 = vmatpush2.msra.mxu0 0.0
    %702 = vmatprep.subr.mxu0 0.0
    %703 = vmatpush2.msra.mxu0 0.0
    %704 = vmatprep.subr.mxu0 0.0
    %705 = vmatpush2.msra.mxu0 0.0
    %706 = vmatprep.subr.mxu0 0.0
    %707 = vmatpush2.msra.mxu0 0.0
    %708 = vmatprep.subr.mxu0 0.0
    %709 = vmatpush2.msra.mxu0 0.0
    %710 = vmatprep.subr.mxu0 0.0
    %711 = vmatpush2.msra.mxu0 0.0
    %712 = vmatprep.mubr.f32.mxu0 0.0
    %713 = vmatmul.mubr.f32.gmra.mxu0 %v575
    %v714 = vpop.f32.mrf.mxu0
    %v715 = vadd.f32 0.0, %v714
    %v716 = vpop.f32.mrf.mxu0
    %717 = vdwg.mxu0
    %v719 = vrot.slane %v715, 4
    %v721 = vadd.f32 %v242, %v719
    %v722 = vxor.u32 %v721, 2147483648
    %v723 = vmul.f32 %v722, 1.442695
    %v724 = vpow.pop %v723
    %v725 = vadd.f32 %v724, 1.0
    %v726 = vrcp.pop %v725
    %v727 = vmul.f32 1.0, %v726
    %v728 = vtanh.pop %v721
    %v730 = vrot.slane %v547, 6
    %v732 = vmul.f32 %v727, %v730
    %734 = vrot.lane.b32.xlu0 %v728, 64
    %v735 = vpop.permute.xlu0 %734
    %v737 = vmul.f32 %v727, %v735
    %739 = vrot.lane.b32.xlu0 %v737, 96
    %v740 = vpop.permute.xlu0 %739
    %v742 = vadd.f32 %v732, %v740
    %v743 = vtanh.pop %v742
    %745 = vrot.lane.b32.xlu0 %v743, 64
    %v746 = vpop.permute.xlu0 %745
    %v748 = vmul.f32 %v727, %v746
    %v750 = vcombine.high %v748, %v748
    %v752 = vunpack.c.l.s4 1983009808
    %v753 = vunpack.c.0.s8 %v752
    %v754 = vlaneseq
    %v755 = vshrl.u32 %v754, 7
    %v756 = vsub.s32 %v753, %v755
    %v757 = vrot.slane %v750, %v756
    %vm759 = vcmask 779776
    %760 = vst.msk [vmem:[%s7] sm:$0x3] %vm759, %v757
    %v761 = vld [vmem:[#allocation4 + $0x40] sm:$0xff]
    %v762 = vld [vmem:[#allocation4 + $0x48] sm:$0xff]
    %v763 = vld [vmem:[#allocation4 + $0x50] sm:$0xff]
    %v764 = vld [vmem:[#allocation4 + $0x58] sm:$0xff]
    %v765 = vrot.slane %v748, 4
    %766 = vrot.lane.b32.xlu0 %v765, 64
    %v767 = vpop.permute.xlu0 %766
    %v768 = vsel %vm262, %v767, 0
    %770 = vmatprep.subr.mxu0 0.0
    %771 = vmatpush1.msra.mxu0 0.0
    %772 = vmatprep.subr.mxu0 0.0
    %773 = vmatpush1.msra.mxu0 0.0
    %774 = vmatprep.subr.mxu0 0.0
    %775 = vmatpush1.msra.mxu0 0.0
    %776 = vmatprep.subr.mxu0 0.0
    %777 = vmatpush1.msra.mxu0 0.0
    %778 = vmatprep.subr.mxu0 0.0
    %779 = vmatpush1.msra.mxu0 0.0
    %780 = vmatprep.subr.mxu0 0.0
    %781 = vmatpush1.msra.mxu0 0.0
    %782 = vmatprep.subr.mxu0 0.0
    %783 = vmatpush1.msra.mxu0 0.0
    %784 = vmatprep.subr.mxu0 0.0
    %785 = vmatpush1.msra.mxu0 0.0
    %786 = vmatprep.subr.mxu0 0.0
    %787 = vmatpush1.msra.mxu0 0.0
    %788 = vmatprep.subr.mxu0 0.0
    %789 = vmatpush1.msra.mxu0 0.0
    %790 = vmatprep.subr.mxu0 0.0
    %791 = vmatpush1.msra.mxu0 0.0
    %792 = vmatprep.subr.mxu0 0.0
    %793 = vmatpush1.msra.mxu0 0.0
    %794 = vmatprep.subr.mxu0 0.0
    %795 = vmatpush1.msra.mxu0 %v764
    %796 = vmatprep.subr.mxu0 0.0
    %797 = vmatpush1.msra.mxu0 %v763
    %798 = vmatprep.subr.mxu0 0.0
    %799 = vmatpush1.msra.mxu0 %v762
    %800 = vmatprep.subr.mxu0 0.0
    %801 = vmatpush1.msra.mxu0 %v761
    %802 = vmatprep.subr.mxu0 0.0
    %803 = vmatpush2.msra.mxu0 0.0
    %804 = vmatprep.subr.mxu0 0.0
    %805 = vmatpush2.msra.mxu0 0.0
    %806 = vmatprep.subr.mxu0 0.0
    %807 = vmatpush2.msra.mxu0 0.0
    %808 = vmatprep.subr.mxu0 0.0
    %809 = vmatpush2.msra.mxu0 0.0
    %810 = vmatprep.subr.mxu0 0.0
    %811 = vmatpush2.msra.mxu0 0.0
    %812 = vmatprep.subr.mxu0 0.0
    %813 = vmatpush2.msra.mxu0 0.0
    %814 = vmatprep.subr.mxu0 0.0
    %815 = vmatpush2.msra.mxu0 0.0
    %816 = vmatprep.subr.mxu0 0.0
    %817 = vmatpush2.msra.mxu0 0.0
    %818 = vmatprep.subr.mxu0 0.0
    %819 = vmatpush2.msra.mxu0 0.0
    %820 = vmatprep.subr.mxu0 0.0
    %821 = vmatpush2.msra.mxu0 0.0
    %822 = vmatprep.subr.mxu0 0.0
    %823 = vmatpush2.msra.mxu0 0.0
    %824 = vmatprep.subr.mxu0 0.0
    %825 = vmatpush2.msra.mxu0 0.0
    %826 = vmatprep.subr.mxu0 0.0
    %827 = vmatpush2.msra.mxu0 0.0
    %828 = vmatprep.subr.mxu0 0.0
    %829 = vmatpush2.msra.mxu0 0.0
    %830 = vmatprep.subr.mxu0 0.0
    %831 = vmatpush2.msra.mxu0 0.0
    %832 = vmatprep.subr.mxu0 0.0
    %833 = vmatpush2.msra.mxu0 0.0
    %834 = vmatprep.mubr.f32.mxu0 0.0
    %835 = vmatmul.mubr.f32.gmra.mxu0 %v768
    %v836 = vpop.f32.mrf.mxu0
    %v837 = vadd.f32 0.0, %v836
    %v838 = vpop.f32.mrf.mxu0
    %839 = vdwg.mxu0
    %v840 = vadd.f32 %v647, %v837
    %841 = vmatprep.subr.mxu0 0.0
    %842 = vmatpush1.msra.mxu0 0.0
    %843 = vmatprep.subr.mxu0 0.0
    %844 = vmatpush1.msra.mxu0 0.0
    %845 = vmatprep.subr.mxu0 0.0
    %846 = vmatpush1.msra.mxu0 0.0
    %847 = vmatprep.subr.mxu0 0.0
    %848 = vmatpush1.msra.mxu0 0.0
    %849 = vmatprep.subr.mxu0 0.0
    %850 = vmatpush1.msra.mxu0 0.0
    %851 = vmatprep.subr.mxu0 0.0
    %852 = vmatpush1.msra.mxu0 0.0
    %853 = vmatprep.subr.mxu0 0.0
    %854 = vmatpush1.msra.mxu0 0.0
    %855 = vmatprep.subr.mxu0 0.0
    %856 = vmatpush1.msra.mxu0 0.0
    %857 = vmatprep.subr.mxu0 0.0
    %858 = vmatpush1.msra.mxu0 0.0
    %859 = vmatprep.subr.mxu0 0.0
    %860 = vmatpush1.msra.mxu0 0.0
    %861 = vmatprep.subr.mxu0 0.0
    %862 = vmatpush1.msra.mxu0 0.0
    %863 = vmatprep.subr.mxu0 0.0
    %864 = vmatpush1.msra.mxu0 0.0
    %865 = vmatprep.subr.mxu0 0.0
    %866 = vmatpush1.msra.mxu0 %v253
    %867 = vmatprep.subr.mxu0 0.0
    %868 = vmatpush1.msra.mxu0 %v252
    %869 = vmatprep.subr.mxu0 0.0
    %870 = vmatpush1.msra.mxu0 %v251
    %871 = vmatprep.subr.mxu0 0.0
    %872 = vmatpush1.msra.mxu0 %v250
    %873 = vmatprep.subr.mxu0 0.0
    %874 = vmatpush2.msra.mxu0 0.0
    %875 = vmatprep.subr.mxu0 0.0
    %876 = vmatpush2.msra.mxu0 0.0
    %877 = vmatprep.subr.mxu0 0.0
    %878 = vmatpush2.msra.mxu0 0.0
    %879 = vmatprep.subr.mxu0 0.0
    %880 = vmatpush2.msra.mxu0 0.0
    %881 = vmatprep.subr.mxu0 0.0
    %882 = vmatpush2.msra.mxu0 0.0
    %883 = vmatprep.subr.mxu0 0.0
    %884 = vmatpush2.msra.mxu0 0.0
    %885 = vmatprep.subr.mxu0 0.0
    %886 = vmatpush2.msra.mxu0 0.0
    %887 = vmatprep.subr.mxu0 0.0
    %888 = vmatpush2.msra.mxu0 0.0
    %889 = vmatprep.subr.mxu0 0.0
    %890 = vmatpush2.msra.mxu0 0.0
    %891 = vmatprep.subr.mxu0 0.0
    %892 = vmatpush2.msra.mxu0 0.0
    %893 = vmatprep.subr.mxu0 0.0
    %894 = vmatpush2.msra.mxu0 0.0
    %895 = vmatprep.subr.mxu0 0.0
    %896 = vmatpush2.msra.mxu0 0.0
    %897 = vmatprep.subr.mxu0 0.0
    %898 = vmatpush2.msra.mxu0 0.0
    %899 = vmatprep.subr.mxu0 0.0
    %900 = vmatpush2.msra.mxu0 0.0
    %901 = vmatprep.subr.mxu0 0.0
    %902 = vmatpush2.msra.mxu0 0.0
    %903 = vmatprep.subr.mxu0 0.0
    %904 = vmatpush2.msra.mxu0 0.0
    %905 = vmatprep.mubr.f32.mxu0 0.0
    %906 = vmatmul.mubr.f32.gmra.mxu0 %v768
    %v907 = vpop.f32.mrf.mxu0
    %v908 = vadd.f32 0.0, %v907
    %v909 = vpop.f32.mrf.mxu0
    %910 = vdwg.mxu0
    %v912 = vrot.slane %v908, 2
    %v914 = vadd.f32 %v242, %v912
    %v915 = vxor.u32 %v914, 2147483648
    %v916 = vmul.f32 %v915, 1.442695
    %v917 = vpow.pop %v916
    %v918 = vadd.f32 %v917, 1.0
    %v919 = vrcp.pop %v918
    %v920 = vmul.f32 1.0, %v919
    %v921 = vtanh.pop %v914
    %v923 = vrot.slane %v742, 6
    %v925 = vmul.f32 %v920, %v923
    %927 = vrot.lane.b32.xlu0 %v921, 64
    %v928 = vpop.permute.xlu0 %927
    %v930 = vmul.f32 %v920, %v928
    %932 = vrot.lane.b32.xlu0 %v930, 96
    %v933 = vpop.permute.xlu0 %932
    %v935 = vadd.f32 %v925, %v933
    %v936 = vtanh.pop %v935
    %938 = vrot.lane.b32.xlu0 %v936, 64
    %v939 = vpop.permute.xlu0 %938
    %v941 = vmul.f32 %v920, %v939
    %v943 = vcombine.high %v941, %v941
    %v945 = vunpack.c.l.s4 1983009808
    %v946 = vunpack.c.0.s8 %v945
    %v947 = vlaneseq
    %v948 = vshrl.u32 %v947, 7
    %v949 = vsub.s32 %v946, %v948
    %v950 = vrot.slane %v943, %v949
    %v951 = vcombine.high %v950, %v950
    %952 = vrot.lane.b32.xlu0 %v951, 32
    %v953 = vpop.permute.xlu0 %952
    %vm955 = vcmask 1042176
    %956 = vst.msk [vmem:[%s7] sm:$0x3] %vm955, %v953
    %v957 = vld [vmem:[#allocation4 + $0x60] sm:$0xff]
    %v958 = vld [vmem:[#allocation4 + $0x68] sm:$0xff]
    %v959 = vld [vmem:[#allocation4 + $0x70] sm:$0xff]
    %v960 = vld [vmem:[#allocation4 + $0x78] sm:$0xff]
    %v961 = vrot.slane %v941, 6
    %962 = vrot.lane.b32.xlu0 %v961, 64
    %v963 = vpop.permute.xlu0 %962
    %v964 = vsel %vm262, %v963, 0
    %966 = vmatprep.subr.mxu0 0.0
    %967 = vmatpush1.msra.mxu0 0.0
    %968 = vmatprep.subr.mxu0 0.0
    %969 = vmatpush1.msra.mxu0 0.0
    %970 = vmatprep.subr.mxu0 0.0
    %971 = vmatpush1.msra.mxu0 0.0
    %972 = vmatprep.subr.mxu0 0.0
    %973 = vmatpush1.msra.mxu0 0.0
    %974 = vmatprep.subr.mxu0 0.0
    %975 = vmatpush1.msra.mxu0 0.0
    %976 = vmatprep.subr.mxu0 0.0
    %977 = vmatpush1.msra.mxu0 0.0
    %978 = vmatprep.subr.mxu0 0.0
    %979 = vmatpush1.msra.mxu0 0.0
    %980 = vmatprep.subr.mxu0 0.0
    %981 = vmatpush1.msra.mxu0 0.0
    %982 = vmatprep.subr.mxu0 0.0
    %983 = vmatpush1.msra.mxu0 0.0
    %984 = vmatprep.subr.mxu0 0.0
    %985 = vmatpush1.msra.mxu0 0.0
    %986 = vmatprep.subr.mxu0 0.0
    %987 = vmatpush1.msra.mxu0 0.0
    %988 = vmatprep.subr.mxu0 0.0
    %989 = vmatpush1.msra.mxu0 0.0
    %990 = vmatprep.subr.mxu0 0.0
    %991 = vmatpush1.msra.mxu0 %v960
    %992 = vmatprep.subr.mxu0 0.0
    %993 = vmatpush1.msra.mxu0 %v959
    %994 = vmatprep.subr.mxu0 0.0
    %995 = vmatpush1.msra.mxu0 %v958
    %996 = vmatprep.subr.mxu0 0.0
    %997 = vmatpush1.msra.mxu0 %v957
    %998 = vmatprep.subr.mxu0 0.0
    %999 = vmatpush2.msra.mxu0 0.0
    %1000 = vmatprep.subr.mxu0 0.0
    %1001 = vmatpush2.msra.mxu0 0.0
    %1002 = vmatprep.subr.mxu0 0.0
    %1003 = vmatpush2.msra.mxu0 0.0
    %1004 = vmatprep.subr.mxu0 0.0
    %1005 = vmatpush2.msra.mxu0 0.0
    %1006 = vmatprep.subr.mxu0 0.0
    %1007 = vmatpush2.msra.mxu0 0.0
    %1008 = vmatprep.subr.mxu0 0.0
    %1009 = vmatpush2.msra.mxu0 0.0
    %1010 = vmatprep.subr.mxu0 0.0
    %1011 = vmatpush2.msra.mxu0 0.0
    %1012 = vmatprep.subr.mxu0 0.0
    %1013 = vmatpush2.msra.mxu0 0.0
    %1014 = vmatprep.subr.mxu0 0.0
    %1015 = vmatpush2.msra.mxu0 0.0
    %1016 = vmatprep.subr.mxu0 0.0
    %1017 = vmatpush2.msra.mxu0 0.0
    %1018 = vmatprep.subr.mxu0 0.0
    %1019 = vmatpush2.msra.mxu0 0.0
    %1020 = vmatprep.subr.mxu0 0.0
    %1021 = vmatpush2.msra.mxu0 0.0
    %1022 = vmatprep.subr.mxu0 0.0
    %1023 = vmatpush2.msra.mxu0 0.0
    %1024 = vmatprep.subr.mxu0 0.0
    %1025 = vmatpush2.msra.mxu0 0.0
    %1026 = vmatprep.subr.mxu0 0.0
    %1027 = vmatpush2.msra.mxu0 0.0
    %1028 = vmatprep.subr.mxu0 0.0
    %1029 = vmatpush2.msra.mxu0 0.0
    %1030 = vmatprep.mubr.f32.mxu0 0.0
    %1031 = vmatmul.mubr.f32.gmra.mxu0 %v964
    %v1032 = vpop.f32.mrf.mxu0
    %v1033 = vadd.f32 0.0, %v1032
    %v1034 = vpop.f32.mrf.mxu0
    %1035 = vdwg.mxu0
    %v1036 = vadd.f32 %v840, %v1033
    %1037 = vmatprep.subr.mxu0 0.0
    %1038 = vmatpush1.msra.mxu0 0.0
    %1039 = vmatprep.subr.mxu0 0.0
    %1040 = vmatpush1.msra.mxu0 0.0
    %1041 = vmatprep.subr.mxu0 0.0
    %1042 = vmatpush1.msra.mxu0 0.0
    %1043 = vmatprep.subr.mxu0 0.0
    %1044 = vmatpush1.msra.mxu0 0.0
    %1045 = vmatprep.subr.mxu0 0.0
    %1046 = vmatpush1.msra.mxu0 0.0
    %1047 = vmatprep.subr.mxu0 0.0
    %1048 = vmatpush1.msra.mxu0 0.0
    %1049 = vmatprep.subr.mxu0 0.0
    %1050 = vmatpush1.msra.mxu0 0.0
    %1051 = vmatprep.subr.mxu0 0.0
    %1052 = vmatpush1.msra.mxu0 0.0
    %1053 = vmatprep.subr.mxu0 0.0
    %1054 = vmatpush1.msra.mxu0 0.0
    %1055 = vmatprep.subr.mxu0 0.0
    %1056 = vmatpush1.msra.mxu0 0.0
    %1057 = vmatprep.subr.mxu0 0.0
    %1058 = vmatpush1.msra.mxu0 0.0
    %1059 = vmatprep.subr.mxu0 0.0
    %1060 = vmatpush1.msra.mxu0 0.0
    %1061 = vmatprep.subr.mxu0 0.0
    %1062 = vmatpush1.msra.mxu0 %v253
    %1063 = vmatprep.subr.mxu0 0.0
    %1064 = vmatpush1.msra.mxu0 %v252
    %1065 = vmatprep.subr.mxu0 0.0
    %1066 = vmatpush1.msra.mxu0 %v251
    %1067 = vmatprep.subr.mxu0 0.0
    %1068 = vmatpush1.msra.mxu0 %v250
    %1069 = vmatprep.subr.mxu0 0.0
    %1070 = vmatpush2.msra.mxu0 0.0
    %1071 = vmatprep.subr.mxu0 0.0
    %1072 = vmatpush2.msra.mxu0 0.0
    %1073 = vmatprep.subr.mxu0 0.0
    %1074 = vmatpush2.msra.mxu0 0.0
    %1075 = vmatprep.subr.mxu0 0.0
    %1076 = vmatpush2.msra.mxu0 0.0
    %1077 = vmatprep.subr.mxu0 0.0
    %1078 = vmatpush2.msra.mxu0 0.0
    %1079 = vmatprep.subr.mxu0 0.0
    %1080 = vmatpush2.msra.mxu0 0.0
    %1081 = vmatprep.subr.mxu0 0.0
    %1082 = vmatpush2.msra.mxu0 0.0
    %1083 = vmatprep.subr.mxu0 0.0
    %1084 = vmatpush2.msra.mxu0 0.0
    %1085 = vmatprep.subr.mxu0 0.0
    %1086 = vmatpush2.msra.mxu0 0.0
    %1087 = vmatprep.subr.mxu0 0.0
    %1088 = vmatpush2.msra.mxu0 0.0
    %1089 = vmatprep.subr.mxu0 0.0
    %1090 = vmatpush2.msra.mxu0 0.0
    %1091 = vmatprep.subr.mxu0 0.0
    %1092 = vmatpush2.msra.mxu0 0.0
    %1093 = vmatprep.subr.mxu0 0.0
    %1094 = vmatpush2.msra.mxu0 0.0
    %1095 = vmatprep.subr.mxu0 0.0
    %1096 = vmatpush2.msra.mxu0 0.0
    %1097 = vmatprep.subr.mxu0 0.0
    %1098 = vmatpush2.msra.mxu0 0.0
    %1099 = vmatprep.subr.mxu0 0.0
    %1100 = vmatpush2.msra.mxu0 0.0
    %1101 = vmatprep.mubr.f32.mxu0 0.0
    %1102 = vmatmul.mubr.f32.gmra.mxu0 %v964
    %v1103 = vpop.f32.mrf.mxu0
    %v1104 = vadd.f32 0.0, %v1103
    %v1105 = vpop.f32.mrf.mxu0
    %1106 = vdwg.mxu0
    %v1107 = vadd.f32 %v247, %v1104
    %v1108 = vxor.u32 %v1107, 2147483648
    %v1109 = vmul.f32 %v1108, 1.442695
    %v1110 = vpow.pop %v1109
    %v1111 = vadd.f32 %v1110, 1.0
    %v1112 = vrcp.pop %v1111
    %v1113 = vmul.f32 1.0, %v1112
    %v1114 = vtanh.pop %v1107
    %v1116 = vrot.slane %v935, 6
    %v1118 = vmul.f32 %v1113, %v1116
    %1120 = vrot.lane.b32.xlu0 %v1114, 64
    %v1121 = vpop.permute.xlu0 %1120
    %v1123 = vmul.f32 %v1113, %v1121
    %1125 = vrot.lane.b32.xlu0 %v1123, 96
    %v1126 = vpop.permute.xlu0 %1125
    %v1128 = vadd.f32 %v1118, %v1126
    %v1129 = vtanh.pop %v1128
    %1131 = vrot.lane.b32.xlu0 %v1129, 64
    %v1132 = vpop.permute.xlu0 %1131
    %v1134 = vmul.f32 %v1113, %v1132
    %v1137 = vunpack.c.l.s4 1983009808
    %v1138 = vunpack.c.0.s8 %v1137
    %v1139 = vlaneseq
    %v1140 = vshrl.u32 %v1139, 7
    %v1141 = vsub.s32 %v1138, %v1140
    %v1142 = vrot.slane %v1134, %v1141
    %1143 = vrot.lane.b32.xlu0 %v1142, 64
    %v1144 = vpop.permute.xlu0 %1143
    %1146 = vst.msk [vmem:[%s7 + $0x2] sm:$0x3] %vm372, %v1144
    %v1147 = vld [vmem:[#allocation4 + $0x80] sm:$0xff]
    %v1148 = vld [vmem:[#allocation4 + $0x88] sm:$0xff]
    %v1149 = vld [vmem:[#allocation4 + $0x90] sm:$0xff]
    %v1150 = vld [vmem:[#allocation4 + $0x98] sm:$0xff]
    %1151 = vrot.lane.b32.xlu0 %v1134, 64
    %v1152 = vpop.permute.xlu0 %1151
    %v1153 = vsel %vm262, %v1152, 0
    %1155 = vmatprep.subr.mxu0 0.0
    %1156 = vmatpush1.msra.mxu0 0.0
    %1157 = vmatprep.subr.mxu0 0.0
    %1158 = vmatpush1.msra.mxu0 0.0
    %1159 = vmatprep.subr.mxu0 0.0
    %1160 = vmatpush1.msra.mxu0 0.0
    %1161 = vmatprep.subr.mxu0 0.0
    %1162 = vmatpush1.msra.mxu0 0.0
    %1163 = vmatprep.subr.mxu0 0.0
    %1164 = vmatpush1.msra.mxu0 0.0
    %1165 = vmatprep.subr.mxu0 0.0
    %1166 = vmatpush1.msra.mxu0 0.0
    %1167 = vmatprep.subr.mxu0 0.0
    %1168 = vmatpush1.msra.mxu0 0.0
    %1169 = vmatprep.subr.mxu0 0.0
    %1170 = vmatpush1.msra.mxu0 0.0
    %1171 = vmatprep.subr.mxu0 0.0
    %1172 = vmatpush1.msra.mxu0 0.0
    %1173 = vmatprep.subr.mxu0 0.0
    %1174 = vmatpush1.msra.mxu0 0.0
    %1175 = vmatprep.subr.mxu0 0.0
    %1176 = vmatpush1.msra.mxu0 0.0
    %1177 = vmatprep.subr.mxu0 0.0
    %1178 = vmatpush1.msra.mxu0 0.0
    %1179 = vmatprep.subr.mxu0 0.0
    %1180 = vmatpush1.msra.mxu0 %v1150
    %1181 = vmatprep.subr.mxu0 0.0
    %1182 = vmatpush1.msra.mxu0 %v1149
    %1183 = vmatprep.subr.mxu0 0.0
    %1184 = vmatpush1.msra.mxu0 %v1148
    %1185 = vmatprep.subr.mxu0 0.0
    %1186 = vmatpush1.msra.mxu0 %v1147
    %1187 = vmatprep.subr.mxu0 0.0
    %1188 = vmatpush2.msra.mxu0 0.0
    %1189 = vmatprep.subr.mxu0 0.0
    %1190 = vmatpush2.msra.mxu0 0.0
    %1191 = vmatprep.subr.mxu0 0.0
    %1192 = vmatpush2.msra.mxu0 0.0
    %1193 = vmatprep.subr.mxu0 0.0
    %1194 = vmatpush2.msra.mxu0 0.0
    %1195 = vmatprep.subr.mxu0 0.0
    %1196 = vmatpush2.msra.mxu0 0.0
    %1197 = vmatprep.subr.mxu0 0.0
    %1198 = vmatpush2.msra.mxu0 0.0
    %1199 = vmatprep.subr.mxu0 0.0
    %1200 = vmatpush2.msra.mxu0 0.0
    %1201 = vmatprep.subr.mxu0 0.0
    %1202 = vmatpush2.msra.mxu0 0.0
    %1203 = vmatprep.subr.mxu0 0.0
    %1204 = vmatpush2.msra.mxu0 0.0
    %1205 = vmatprep.subr.mxu0 0.0
    %1206 = vmatpush2.msra.mxu0 0.0
    %1207 = vmatprep.subr.mxu0 0.0
    %1208 = vmatpush2.msra.mxu0 0.0
    %1209 = vmatprep.subr.mxu0 0.0
    %1210 = vmatpush2.msra.mxu0 0.0
    %1211 = vmatprep.subr.mxu0 0.0
    %1212 = vmatpush2.msra.mxu0 0.0
    %1213 = vmatprep.subr.mxu0 0.0
    %1214 = vmatpush2.msra.mxu0 0.0
    %1215 = vmatprep.subr.mxu0 0.0
    %1216 = vmatpush2.msra.mxu0 0.0
    %1217 = vmatprep.subr.mxu0 0.0
    %1218 = vmatpush2.msra.mxu0 0.0
    %1219 = vmatprep.mubr.f32.mxu0 0.0
    %1220 = vmatmul.mubr.f32.gmra.mxu0 %v1153
    %v1221 = vpop.f32.mrf.mxu0
    %v1222 = vadd.f32 0.0, %v1221
    %v1223 = vpop.f32.mrf.mxu0
    %1224 = vdwg.mxu0
    %v1225 = vadd.f32 %v1036, %v1222
    %1226 = vmatprep.subr.mxu0 0.0
    %1227 = vmatpush1.msra.mxu0 0.0
    %1228 = vmatprep.subr.mxu0 0.0
    %1229 = vmatpush1.msra.mxu0 0.0
    %1230 = vmatprep.subr.mxu0 0.0
    %1231 = vmatpush1.msra.mxu0 0.0
    %1232 = vmatprep.subr.mxu0 0.0
    %1233 = vmatpush1.msra.mxu0 0.0
    %1234 = vmatprep.subr.mxu0 0.0
    %1235 = vmatpush1.msra.mxu0 0.0
    %1236 = vmatprep.subr.mxu0 0.0
    %1237 = vmatpush1.msra.mxu0 0.0
    %1238 = vmatprep.subr.mxu0 0.0
    %1239 = vmatpush1.msra.mxu0 0.0
    %1240 = vmatprep.subr.mxu0 0.0
    %1241 = vmatpush1.msra.mxu0 0.0
    %1242 = vmatprep.subr.mxu0 0.0
    %1243 = vmatpush1.msra.mxu0 0.0
    %1244 = vmatprep.subr.mxu0 0.0
    %1245 = vmatpush1.msra.mxu0 0.0
    %1246 = vmatprep.subr.mxu0 0.0
    %1247 = vmatpush1.msra.mxu0 0.0
    %1248 = vmatprep.subr.mxu0 0.0
    %1249 = vmatpush1.msra.mxu0 0.0
    %1250 = vmatprep.subr.mxu0 0.0
    %1251 = vmatpush1.msra.mxu0 %v253
    %1252 = vmatprep.subr.mxu0 0.0
    %1253 = vmatpush1.msra.mxu0 %v252
    %1254 = vmatprep.subr.mxu0 0.0
    %1255 = vmatpush1.msra.mxu0 %v251
    %1256 = vmatprep.subr.mxu0 0.0
    %1257 = vmatpush1.msra.mxu0 %v250
    %1258 = vmatprep.subr.mxu0 0.0
    %1259 = vmatpush2.msra.mxu0 0.0
    %1260 = vmatprep.subr.mxu0 0.0
    %1261 = vmatpush2.msra.mxu0 0.0
    %1262 = vmatprep.subr.mxu0 0.0
    %1263 = vmatpush2.msra.mxu0 0.0
    %1264 = vmatprep.subr.mxu0 0.0
    %1265 = vmatpush2.msra.mxu0 0.0
    %1266 = vmatprep.subr.mxu0 0.0
    %1267 = vmatpush2.msra.mxu0 0.0
    %1268 = vmatprep.subr.mxu0 0.0
    %1269 = vmatpush2.msra.mxu0 0.0
    %1270 = vmatprep.subr.mxu0 0.0
    %1271 = vmatpush2.msra.mxu0 0.0
    %1272 = vmatprep.subr.mxu0 0.0
    %1273 = vmatpush2.msra.mxu0 0.0
    %1274 = vmatprep.subr.mxu0 0.0
    %1275 = vmatpush2.msra.mxu0 0.0
    %1276 = vmatprep.subr.mxu0 0.0
    %1277 = vmatpush2.msra.mxu0 0.0
    %1278 = vmatprep.subr.mxu0 0.0
    %1279 = vmatpush2.msra.mxu0 0.0
    %1280 = vmatprep.subr.mxu0 0.0
    %1281 = vmatpush2.msra.mxu0 0.0
    %1282 = vmatprep.subr.mxu0 0.0
    %1283 = vmatpush2.msra.mxu0 0.0
    %1284 = vmatprep.subr.mxu0 0.0
    %1285 = vmatpush2.msra.mxu0 0.0
    %1286 = vmatprep.subr.mxu0 0.0
    %1287 = vmatpush2.msra.mxu0 0.0
    %1288 = vmatprep.subr.mxu0 0.0
    %1289 = vmatpush2.msra.mxu0 0.0
    %1290 = vmatprep.mubr.f32.mxu0 0.0
    %1291 = vmatmul.mubr.f32.gmra.mxu0 %v1153
    %v1292 = vpop.f32.mrf.mxu0
    %v1293 = vadd.f32 0.0, %v1292
    %v1294 = vpop.f32.mrf.mxu0
    %1295 = vdwg.mxu0
    %v1297 = vrot.slane %v1293, 6
    %v1299 = vadd.f32 %v247, %v1297
    %v1300 = vxor.u32 %v1299, 2147483648
    %v1301 = vmul.f32 %v1300, 1.442695
    %v1302 = vpow.pop %v1301
    %v1303 = vadd.f32 %v1302, 1.0
    %v1304 = vrcp.pop %v1303
    %v1305 = vmul.f32 1.0, %v1304
    %v1306 = vtanh.pop %v1299
    %v1308 = vrot.slane %v1128, 6
    %v1310 = vmul.f32 %v1305, %v1308
    %1312 = vrot.lane.b32.xlu0 %v1306, 64
    %v1313 = vpop.permute.xlu0 %1312
    %v1315 = vmul.f32 %v1305, %v1313
    %1317 = vrot.lane.b32.xlu0 %v1315, 96
    %v1318 = vpop.permute.xlu0 %1317
    %v1320 = vadd.f32 %v1310, %v1318
    %v1321 = vtanh.pop %v1320
    %1323 = vrot.lane.b32.xlu0 %v1321, 64
    %v1324 = vpop.permute.xlu0 %1323
    %v1326 = vmul.f32 %v1305, %v1324
    %v1329 = vunpack.c.l.s4 1983009808
    %v1330 = vunpack.c.0.s8 %v1329
    %v1331 = vlaneseq
    %v1332 = vshrl.u32 %v1331, 7
    %v1333 = vsub.s32 %v1330, %v1332
    %v1334 = vrot.slane %v1326, %v1333
    %v1335 = vcombine.high %v1334, %v1334
    %1336 = vrot.lane.b32.xlu0 %v1335, 96
    %v1337 = vpop.permute.xlu0 %1336
    %1339 = vst.msk [vmem:[%s7 + $0x2] sm:$0x3] %vm566, %v1337
    %v1340 = vld [vmem:[#allocation4 + $0xa0] sm:$0xff]
    %v1341 = vld [vmem:[#allocation4 + $0xa8] sm:$0xff]
    %v1342 = vld [vmem:[#allocation4 + $0xb0] sm:$0xff]
    %v1343 = vld [vmem:[#allocation4 + $0xb8] sm:$0xff]
    %v1344 = vrot.slane %v1326, 2
    %1345 = vrot.lane.b32.xlu0 %v1344, 64
    %v1346 = vpop.permute.xlu0 %1345
    %v1347 = vsel %vm262, %v1346, 0
    %1349 = vmatprep.subr.mxu0 0.0
    %1350 = vmatpush1.msra.mxu0 0.0
    %1351 = vmatprep.subr.mxu0 0.0
    %1352 = vmatpush1.msra.mxu0 0.0
    %1353 = vmatprep.subr.mxu0 0.0
    %1354 = vmatpush1.msra.mxu0 0.0
    %1355 = vmatprep.subr.mxu0 0.0
    %1356 = vmatpush1.msra.mxu0 0.0
    %1357 = vmatprep.subr.mxu0 0.0
    %1358 = vmatpush1.msra.mxu0 0.0
    %1359 = vmatprep.subr.mxu0 0.0
    %1360 = vmatpush1.msra.mxu0 0.0
    %1361 = vmatprep.subr.mxu0 0.0
    %1362 = vmatpush1.msra.mxu0 0.0
    %1363 = vmatprep.subr.mxu0 0.0
    %1364 = vmatpush1.msra.mxu0 0.0
    %1365 = vmatprep.subr.mxu0 0.0
    %1366 = vmatpush1.msra.mxu0 0.0
    %1367 = vmatprep.subr.mxu0 0.0
    %1368 = vmatpush1.msra.mxu0 0.0
    %1369 = vmatprep.subr.mxu0 0.0
    %1370 = vmatpush1.msra.mxu0 0.0
    %1371 = vmatprep.subr.mxu0 0.0
    %1372 = vmatpush1.msra.mxu0 0.0
    %1373 = vmatprep.subr.mxu0 0.0
    %1374 = vmatpush1.msra.mxu0 %v1343
    %1375 = vmatprep.subr.mxu0 0.0
    %1376 = vmatpush1.msra.mxu0 %v1342
    %1377 = vmatprep.subr.mxu0 0.0
    %1378 = vmatpush1.msra.mxu0 %v1341
    %1379 = vmatprep.subr.mxu0 0.0
    %1380 = vmatpush1.msra.mxu0 %v1340
    %1381 = vmatprep.subr.mxu0 0.0
    %1382 = vmatpush2.msra.mxu0 0.0
    %1383 = vmatprep.subr.mxu0 0.0
    %1384 = vmatpush2.msra.mxu0 0.0
    %1385 = vmatprep.subr.mxu0 0.0
    %1386 = vmatpush2.msra.mxu0 0.0
    %1387 = vmatprep.subr.mxu0 0.0
    %1388 = vmatpush2.msra.mxu0 0.0
    %1389 = vmatprep.subr.mxu0 0.0
    %1390 = vmatpush2.msra.mxu0 0.0
    %1391 = vmatprep.subr.mxu0 0.0
    %1392 = vmatpush2.msra.mxu0 0.0
    %1393 = vmatprep.subr.mxu0 0.0
    %1394 = vmatpush2.msra.mxu0 0.0
    %1395 = vmatprep.subr.mxu0 0.0
    %1396 = vmatpush2.msra.mxu0 0.0
    %1397 = vmatprep.subr.mxu0 0.0
    %1398 = vmatpush2.msra.mxu0 0.0
    %1399 = vmatprep.subr.mxu0 0.0
    %1400 = vmatpush2.msra.mxu0 0.0
    %1401 = vmatprep.subr.mxu0 0.0
    %1402 = vmatpush2.msra.mxu0 0.0
    %1403 = vmatprep.subr.mxu0 0.0
    %1404 = vmatpush2.msra.mxu0 0.0
    %1405 = vmatprep.subr.mxu0 0.0
    %1406 = vmatpush2.msra.mxu0 0.0
    %1407 = vmatprep.subr.mxu0 0.0
    %1408 = vmatpush2.msra.mxu0 0.0
    %1409 = vmatprep.subr.mxu0 0.0
    %1410 = vmatpush2.msra.mxu0 0.0
    %1411 = vmatprep.subr.mxu0 0.0
    %1412 = vmatpush2.msra.mxu0 0.0
    %1413 = vmatprep.mubr.f32.mxu0 0.0
    %1414 = vmatmul.mubr.f32.gmra.mxu0 %v1347
    %v1415 = vpop.f32.mrf.mxu0
    %v1416 = vadd.f32 0.0, %v1415
    %v1417 = vpop.f32.mrf.mxu0
    %1418 = vdwg.mxu0
    %v1419 = vadd.f32 %v1225, %v1416
    %1420 = vmatprep.subr.mxu0 0.0
    %1421 = vmatpush1.msra.mxu0 0.0
    %1422 = vmatprep.subr.mxu0 0.0
    %1423 = vmatpush1.msra.mxu0 0.0
    %1424 = vmatprep.subr.mxu0 0.0
    %1425 = vmatpush1.msra.mxu0 0.0
    %1426 = vmatprep.subr.mxu0 0.0
    %1427 = vmatpush1.msra.mxu0 0.0
    %1428 = vmatprep.subr.mxu0 0.0
    %1429 = vmatpush1.msra.mxu0 0.0
    %1430 = vmatprep.subr.mxu0 0.0
    %1431 = vmatpush1.msra.mxu0 0.0
    %1432 = vmatprep.subr.mxu0 0.0
    %1433 = vmatpush1.msra.mxu0 0.0
    %1434 = vmatprep.subr.mxu0 0.0
    %1435 = vmatpush1.msra.mxu0 0.0
    %1436 = vmatprep.subr.mxu0 0.0
    %1437 = vmatpush1.msra.mxu0 0.0
    %1438 = vmatprep.subr.mxu0 0.0
    %1439 = vmatpush1.msra.mxu0 0.0
    %1440 = vmatprep.subr.mxu0 0.0
    %1441 = vmatpush1.msra.mxu0 0.0
    %1442 = vmatprep.subr.mxu0 0.0
    %1443 = vmatpush1.msra.mxu0 0.0
    %1444 = vmatprep.subr.mxu0 0.0
    %1445 = vmatpush1.msra.mxu0 %v253
    %1446 = vmatprep.subr.mxu0 0.0
    %1447 = vmatpush1.msra.mxu0 %v252
    %1448 = vmatprep.subr.mxu0 0.0
    %1449 = vmatpush1.msra.mxu0 %v251
    %1450 = vmatprep.subr.mxu0 0.0
    %1451 = vmatpush1.msra.mxu0 %v250
    %1452 = vmatprep.subr.mxu0 0.0
    %1453 = vmatpush2.msra.mxu0 0.0
    %1454 = vmatprep.subr.mxu0 0.0
    %1455 = vmatpush2.msra.mxu0 0.0
    %1456 = vmatprep.subr.mxu0 0.0
    %1457 = vmatpush2.msra.mxu0 0.0
    %1458 = vmatprep.subr.mxu0 0.0
    %1459 = vmatpush2.msra.mxu0 0.0
    %1460 = vmatprep.subr.mxu0 0.0
    %1461 = vmatpush2.msra.mxu0 0.0
    %1462 = vmatprep.subr.mxu0 0.0
    %1463 = vmatpush2.msra.mxu0 0.0
    %1464 = vmatprep.subr.mxu0 0.0
    %1465 = vmatpush2.msra.mxu0 0.0
    %1466 = vmatprep.subr.mxu0 0.0
    %1467 = vmatpush2.msra.mxu0 0.0
    %1468 = vmatprep.subr.mxu0 0.0
    %1469 = vmatpush2.msra.mxu0 0.0
    %1470 = vmatprep.subr.mxu0 0.0
    %1471 = vmatpush2.msra.mxu0 0.0
    %1472 = vmatprep.subr.mxu0 0.0
    %1473 = vmatpush2.msra.mxu0 0.0
    %1474 = vmatprep.subr.mxu0 0.0
    %1475 = vmatpush2.msra.mxu0 0.0
    %1476 = vmatprep.subr.mxu0 0.0
    %1477 = vmatpush2.msra.mxu0 0.0
    %1478 = vmatprep.subr.mxu0 0.0
    %1479 = vmatpush2.msra.mxu0 0.0
    %1480 = vmatprep.subr.mxu0 0.0
    %1481 = vmatpush2.msra.mxu0 0.0
    %1482 = vmatprep.subr.mxu0 0.0
    %1483 = vmatpush2.msra.mxu0 0.0
    %1484 = vmatprep.mubr.f32.mxu0 0.0
    %1485 = vmatmul.mubr.f32.gmra.mxu0 %v1347
    %v1486 = vpop.f32.mrf.mxu0
    %v1487 = vadd.f32 0.0, %v1486
    %v1488 = vpop.f32.mrf.mxu0
    %1489 = vdwg.mxu0
    %v1491 = vrot.slane %v1487, 4
    %v1493 = vadd.f32 %v247, %v1491
    %v1494 = vxor.u32 %v1493, 2147483648
    %v1495 = vmul.f32 %v1494, 1.442695
    %v1496 = vpow.pop %v1495
    %v1497 = vadd.f32 %v1496, 1.0
    %v1498 = vrcp.pop %v1497
    %v1499 = vmul.f32 1.0, %v1498
    %v1500 = vtanh.pop %v1493
    %v1502 = vrot.slane %v1320, 6
    %v1504 = vmul.f32 %v1499, %v1502
    %1506 = vrot.lane.b32.xlu0 %v1500, 64
    %v1507 = vpop.permute.xlu0 %1506
    %v1509 = vmul.f32 %v1499, %v1507
    %1511 = vrot.lane.b32.xlu0 %v1509, 96
    %v1512 = vpop.permute.xlu0 %1511
    %v1514 = vadd.f32 %v1504, %v1512
    %v1515 = vtanh.pop %v1514
    %1517 = vrot.lane.b32.xlu0 %v1515, 64
    %v1518 = vpop.permute.xlu0 %1517
    %v1520 = vmul.f32 %v1499, %v1518
    %v1522 = vcombine.high %v1520, %v1520
    %v1524 = vunpack.c.l.s4 1983009808
    %v1525 = vunpack.c.0.s8 %v1524
    %v1526 = vlaneseq
    %v1527 = vshrl.u32 %v1526, 7
    %v1528 = vsub.s32 %v1525, %v1527
    %v1529 = vrot.slane %v1522, %v1528
    %1531 = vst.msk [vmem:[%s7 + $0x2] sm:$0x3] %vm759, %v1529
    %v1532 = vld [vmem:[#allocation4 + $0xc0] sm:$0xff]
    %v1533 = vld [vmem:[#allocation4 + $0xc8] sm:$0xff]
    %v1534 = vld [vmem:[#allocation4 + $0xd0] sm:$0xff]
    %v1535 = vld [vmem:[#allocation4 + $0xd8] sm:$0xff]
    %v1536 = vrot.slane %v1520, 4
    %1537 = vrot.lane.b32.xlu0 %v1536, 64
    %v1538 = vpop.permute.xlu0 %1537
    %v1539 = vsel %vm262, %v1538, 0
    %1541 = vmatprep.subr.mxu0 0.0
    %1542 = vmatpush1.msra.mxu0 0.0
    %1543 = vmatprep.subr.mxu0 0.0
    %1544 = vmatpush1.msra.mxu0 0.0
    %1545 = vmatprep.subr.mxu0 0.0
    %1546 = vmatpush1.msra.mxu0 0.0
    %1547 = vmatprep.subr.mxu0 0.0
    %1548 = vmatpush1.msra.mxu0 0.0
    %1549 = vmatprep.subr.mxu0 0.0
    %1550 = vmatpush1.msra.mxu0 0.0
    %1551 = vmatprep.subr.mxu0 0.0
    %1552 = vmatpush1.msra.mxu0 0.0
    %1553 = vmatprep.subr.mxu0 0.0
    %1554 = vmatpush1.msra.mxu0 0.0
    %1555 = vmatprep.subr.mxu0 0.0
    %1556 = vmatpush1.msra.mxu0 0.0
    %1557 = vmatprep.subr.mxu0 0.0
    %1558 = vmatpush1.msra.mxu0 0.0
    %1559 = vmatprep.subr.mxu0 0.0
    %1560 = vmatpush1.msra.mxu0 0.0
    %1561 = vmatprep.subr.mxu0 0.0
    %1562 = vmatpush1.msra.mxu0 0.0
    %1563 = vmatprep.subr.mxu0 0.0
    %1564 = vmatpush1.msra.mxu0 0.0
    %1565 = vmatprep.subr.mxu0 0.0
    %1566 = vmatpush1.msra.mxu0 %v1535
    %1567 = vmatprep.subr.mxu0 0.0
    %1568 = vmatpush1.msra.mxu0 %v1534
    %1569 = vmatprep.subr.mxu0 0.0
    %1570 = vmatpush1.msra.mxu0 %v1533
    %1571 = vmatprep.subr.mxu0 0.0
    %1572 = vmatpush1.msra.mxu0 %v1532
    %1573 = vmatprep.subr.mxu0 0.0
    %1574 = vmatpush2.msra.mxu0 0.0
    %1575 = vmatprep.subr.mxu0 0.0
    %1576 = vmatpush2.msra.mxu0 0.0
    %1577 = vmatprep.subr.mxu0 0.0
    %1578 = vmatpush2.msra.mxu0 0.0
    %1579 = vmatprep.subr.mxu0 0.0
    %1580 = vmatpush2.msra.mxu0 0.0
    %1581 = vmatprep.subr.mxu0 0.0
    %1582 = vmatpush2.msra.mxu0 0.0
    %1583 = vmatprep.subr.mxu0 0.0
    %1584 = vmatpush2.msra.mxu0 0.0
    %1585 = vmatprep.subr.mxu0 0.0
    %1586 = vmatpush2.msra.mxu0 0.0
    %1587 = vmatprep.subr.mxu0 0.0
    %1588 = vmatpush2.msra.mxu0 0.0
    %1589 = vmatprep.subr.mxu0 0.0
    %1590 = vmatpush2.msra.mxu0 0.0
    %1591 = vmatprep.subr.mxu0 0.0
    %1592 = vmatpush2.msra.mxu0 0.0
    %1593 = vmatprep.subr.mxu0 0.0
    %1594 = vmatpush2.msra.mxu0 0.0
    %1595 = vmatprep.subr.mxu0 0.0
    %1596 = vmatpush2.msra.mxu0 0.0
    %1597 = vmatprep.subr.mxu0 0.0
    %1598 = vmatpush2.msra.mxu0 0.0
    %1599 = vmatprep.subr.mxu0 0.0
    %1600 = vmatpush2.msra.mxu0 0.0
    %1601 = vmatprep.subr.mxu0 0.0
    %1602 = vmatpush2.msra.mxu0 0.0
    %1603 = vmatprep.subr.mxu0 0.0
    %1604 = vmatpush2.msra.mxu0 0.0
    %1605 = vmatprep.mubr.f32.mxu0 0.0
    %1606 = vmatmul.mubr.f32.gmra.mxu0 %v1539
    %v1607 = vpop.f32.mrf.mxu0
    %v1608 = vadd.f32 0.0, %v1607
    %v1609 = vpop.f32.mrf.mxu0
    %1610 = vdwg.mxu0
    %v1611 = vadd.f32 %v1419, %v1608
    %1612 = vmatprep.subr.mxu0 0.0
    %1613 = vmatpush1.msra.mxu0 0.0
    %1614 = vmatprep.subr.mxu0 0.0
    %1615 = vmatpush1.msra.mxu0 0.0
    %1616 = vmatprep.subr.mxu0 0.0
    %1617 = vmatpush1.msra.mxu0 0.0
    %1618 = vmatprep.subr.mxu0 0.0
    %1619 = vmatpush1.msra.mxu0 0.0
    %1620 = vmatprep.subr.mxu0 0.0
    %1621 = vmatpush1.msra.mxu0 0.0
    %1622 = vmatprep.subr.mxu0 0.0
    %1623 = vmatpush1.msra.mxu0 0.0
    %1624 = vmatprep.subr.mxu0 0.0
    %1625 = vmatpush1.msra.mxu0 0.0
    %1626 = vmatprep.subr.mxu0 0.0
    %1627 = vmatpush1.msra.mxu0 0.0
    %1628 = vmatprep.subr.mxu0 0.0
    %1629 = vmatpush1.msra.mxu0 0.0
    %1630 = vmatprep.subr.mxu0 0.0
    %1631 = vmatpush1.msra.mxu0 0.0
    %1632 = vmatprep.subr.mxu0 0.0
    %1633 = vmatpush1.msra.mxu0 0.0
    %1634 = vmatprep.subr.mxu0 0.0
    %1635 = vmatpush1.msra.mxu0 0.0
    %1636 = vmatprep.subr.mxu0 0.0
    %1637 = vmatpush1.msra.mxu0 %v253
    %1638 = vmatprep.subr.mxu0 0.0
    %1639 = vmatpush1.msra.mxu0 %v252
    %1640 = vmatprep.subr.mxu0 0.0
    %1641 = vmatpush1.msra.mxu0 %v251
    %1642 = vmatprep.subr.mxu0 0.0
    %1643 = vmatpush1.msra.mxu0 %v250
    %1644 = vmatprep.subr.mxu0 0.0
    %1645 = vmatpush2.msra.mxu0 0.0
    %1646 = vmatprep.subr.mxu0 0.0
    %1647 = vmatpush2.msra.mxu0 0.0
    %1648 = vmatprep.subr.mxu0 0.0
    %1649 = vmatpush2.msra.mxu0 0.0
    %1650 = vmatprep.subr.mxu0 0.0
    %1651 = vmatpush2.msra.mxu0 0.0
    %1652 = vmatprep.subr.mxu0 0.0
    %1653 = vmatpush2.msra.mxu0 0.0
    %1654 = vmatprep.subr.mxu0 0.0
    %1655 = vmatpush2.msra.mxu0 0.0
    %1656 = vmatprep.subr.mxu0 0.0
    %1657 = vmatpush2.msra.mxu0 0.0
    %1658 = vmatprep.subr.mxu0 0.0
    %1659 = vmatpush2.msra.mxu0 0.0
    %1660 = vmatprep.subr.mxu0 0.0
    %1661 = vmatpush2.msra.mxu0 0.0
    %1662 = vmatprep.subr.mxu0 0.0
    %1663 = vmatpush2.msra.mxu0 0.0
    %1664 = vmatprep.subr.mxu0 0.0
    %1665 = vmatpush2.msra.mxu0 0.0
    %1666 = vmatprep.subr.mxu0 0.0
    %1667 = vmatpush2.msra.mxu0 0.0
    %1668 = vmatprep.subr.mxu0 0.0
    %1669 = vmatpush2.msra.mxu0 0.0
    %1670 = vmatprep.subr.mxu0 0.0
    %1671 = vmatpush2.msra.mxu0 0.0
    %1672 = vmatprep.subr.mxu0 0.0
    %1673 = vmatpush2.msra.mxu0 0.0
    %1674 = vmatprep.subr.mxu0 0.0
    %1675 = vmatpush2.msra.mxu0 0.0
    %1676 = vmatprep.mubr.f32.mxu0 0.0
    %1677 = vmatmul.mubr.f32.gmra.mxu0 %v1539
    %v1678 = vpop.f32.mrf.mxu0
    %v1679 = vadd.f32 0.0, %v1678
    %v1680 = vpop.f32.mrf.mxu0
    %1681 = vdwg.mxu0
    %v1683 = vrot.slane %v1679, 2
    %v1685 = vadd.f32 %v247, %v1683
    %v1686 = vxor.u32 %v1685, 2147483648
    %v1687 = vmul.f32 %v1686, 1.442695
    %v1688 = vpow.pop %v1687
    %v1689 = vadd.f32 %v1688, 1.0
    %v1690 = vrcp.pop %v1689
    %v1691 = vmul.f32 1.0, %v1690
    %v1692 = vtanh.pop %v1685
    %v1694 = vrot.slane %v1514, 6
    %v1696 = vmul.f32 %v1691, %v1694
    %1698 = vrot.lane.b32.xlu0 %v1692, 64
    %v1699 = vpop.permute.xlu0 %1698
    %v1701 = vmul.f32 %v1691, %v1699
    %1703 = vrot.lane.b32.xlu0 %v1701, 96
    %v1704 = vpop.permute.xlu0 %1703
    %v1706 = vadd.f32 %v1696, %v1704
    %v1707 = vtanh.pop %v1706
    %1709 = vrot.lane.b32.xlu0 %v1707, 64
    %v1710 = vpop.permute.xlu0 %1709
    %v1712 = vmul.f32 %v1691, %v1710
    %v1714 = vcombine.high %v1712, %v1712
    %v1716 = vunpack.c.l.s4 1983009808
    %v1717 = vunpack.c.0.s8 %v1716
    %v1718 = vlaneseq
    %v1719 = vshrl.u32 %v1718, 7
    %v1720 = vsub.s32 %v1717, %v1719
    %v1721 = vrot.slane %v1714, %v1720
    %v1722 = vcombine.high %v1721, %v1721
    %1723 = vrot.lane.b32.xlu0 %v1722, 32
    %v1724 = vpop.permute.xlu0 %1723
    %1726 = vst.msk [vmem:[%s7 + $0x2] sm:$0x3] %vm955, %v1724
    %v1727 = vld [vmem:[#allocation4 + $0xe0] sm:$0xff]
    %v1728 = vld [vmem:[#allocation4 + $0xe8] sm:$0xff]
    %v1729 = vld [vmem:[#allocation4 + $0xf0] sm:$0xff]
    %v1730 = vld [vmem:[#allocation4 + $0xf8] sm:$0xff]
    %v1731 = vrot.slane %v1712, 6
    %1732 = vrot.lane.b32.xlu0 %v1731, 64
    %v1733 = vpop.permute.xlu0 %1732
    %v1734 = vsel %vm262, %v1733, 0
    %1736 = vmatprep.subr.mxu0 0.0
    %1737 = vmatpush1.msra.mxu0 0.0
    %1738 = vmatprep.subr.mxu0 0.0
    %1739 = vmatpush1.msra.mxu0 0.0
    %1740 = vmatprep.subr.mxu0 0.0
    %1741 = vmatpush1.msra.mxu0 0.0
    %1742 = vmatprep.subr.mxu0 0.0
    %1743 = vmatpush1.msra.mxu0 0.0
    %1744 = vmatprep.subr.mxu0 0.0
    %1745 = vmatpush1.msra.mxu0 0.0
    %1746 = vmatprep.subr.mxu0 0.0
    %1747 = vmatpush1.msra.mxu0 0.0
    %1748 = vmatprep.subr.mxu0 0.0
    %1749 = vmatpush1.msra.mxu0 0.0
    %1750 = vmatprep.subr.mxu0 0.0
    %1751 = vmatpush1.msra.mxu0 0.0
    %1752 = vmatprep.subr.mxu0 0.0
    %1753 = vmatpush1.msra.mxu0 0.0
    %1754 = vmatprep.subr.mxu0 0.0
    %1755 = vmatpush1.msra.mxu0 0.0
    %1756 = vmatprep.subr.mxu0 0.0
    %1757 = vmatpush1.msra.mxu0 0.0
    %1758 = vmatprep.subr.mxu0 0.0
    %1759 = vmatpush1.msra.mxu0 0.0
    %1760 = vmatprep.subr.mxu0 0.0
    %1761 = vmatpush1.msra.mxu0 %v1730
    %1762 = vmatprep.subr.mxu0 0.0
    %1763 = vmatpush1.msra.mxu0 %v1729
    %1764 = vmatprep.subr.mxu0 0.0
    %1765 = vmatpush1.msra.mxu0 %v1728
    %1766 = vmatprep.subr.mxu0 0.0
    %1767 = vmatpush1.msra.mxu0 %v1727
    %1768 = vmatprep.subr.mxu0 0.0
    %1769 = vmatpush2.msra.mxu0 0.0
    %1770 = vmatprep.subr.mxu0 0.0
    %1771 = vmatpush2.msra.mxu0 0.0
    %1772 = vmatprep.subr.mxu0 0.0
    %1773 = vmatpush2.msra.mxu0 0.0
    %1774 = vmatprep.subr.mxu0 0.0
    %1775 = vmatpush2.msra.mxu0 0.0
    %1776 = vmatprep.subr.mxu0 0.0
    %1777 = vmatpush2.msra.mxu0 0.0
    %1778 = vmatprep.subr.mxu0 0.0
    %1779 = vmatpush2.msra.mxu0 0.0
    %1780 = vmatprep.subr.mxu0 0.0
    %1781 = vmatpush2.msra.mxu0 0.0
    %1782 = vmatprep.subr.mxu0 0.0
    %1783 = vmatpush2.msra.mxu0 0.0
    %1784 = vmatprep.subr.mxu0 0.0
    %1785 = vmatpush2.msra.mxu0 0.0
    %1786 = vmatprep.subr.mxu0 0.0
    %1787 = vmatpush2.msra.mxu0 0.0
    %1788 = vmatprep.subr.mxu0 0.0
    %1789 = vmatpush2.msra.mxu0 0.0
    %1790 = vmatprep.subr.mxu0 0.0
    %1791 = vmatpush2.msra.mxu0 0.0
    %1792 = vmatprep.subr.mxu0 0.0
    %1793 = vmatpush2.msra.mxu0 0.0
    %1794 = vmatprep.subr.mxu0 0.0
    %1795 = vmatpush2.msra.mxu0 0.0
    %1796 = vmatprep.subr.mxu0 0.0
    %1797 = vmatpush2.msra.mxu0 0.0
    %1798 = vmatprep.subr.mxu0 0.0
    %1799 = vmatpush2.msra.mxu0 0.0
    %1800 = vmatprep.mubr.f32.mxu0 0.0
    %1801 = vmatmul.mubr.f32.gmra.mxu0 %v1734
    %v1802 = vpop.f32.mrf.mxu0
    %v1803 = vadd.f32 0.0, %v1802
    %v1804 = vpop.f32.mrf.mxu0
    %1805 = vdwg.mxu0
    %v1806 = vadd.f32 %v1611, %v1803
    %1807 = vst [vmem:[#allocation7] sm:$0x3] %v1806
    %v1808 = vlaneseq
    %v1809 = vand.u32 %v1808, 127
    %vm1810 = vcmp.lt.s32.totalorder %v1809, 4
    %v1811 = vsel %vm1810, %v1806, -inf
    %v1812 = vsel %vm140, %v1811, -inf
    %1813 = vmax.xlane.f32.xlu0 %v1812
    %v1814 = vpop.xlane.xlu0 %1813
    %vm1815 = vcmp.eq.f32.partialorder %v1811, %v1814
    %vm1816 = vmand %vm1815, %vm1810
    %v1817 = vsel %vm1816, %v1809, 128
    %v1818 = vsel %vm140, %v1817, 2147483647
    %v1819 = vand.u32 %v1818, 65535
    %v1820 = vshra.s32 %v1818, 16
    %v1821 = vcvt.s32.f32 %v1819
    %v1822 = vcvt.s32.f32 %v1820
    %1823 = vmin.xlane.f32.xlu0 %v1822
    %v1824 = vpop.xlane.xlu0 %1823
    %vm1825 = vcmp.eq.f32.partialorder %v1822, %v1824
    %v1826 = vsel %vm1825, %v1821, inf
    %1827 = vmin.xlane.f32.xlu0 %v1826
    %v1828 = vpop.xlane.xlu0 %1827
    %v1829 = vcvt.f32.s32 %v1828
    %v1830 = vcvt.f32.s32 %v1824
    %v1831 = vshll.u32 %v1830, 16
    %v1832 = vadd.s32 %v1831, %v1829
    %vm1833 = vcmask 1024
    %1834 = vst.msk [vmem:[%s9] sm:$0x3] %vm1833, %v1832
    // Predicated region
    $region30: #{lstm_text_cls_forward.1} parent=1 // pred_check
      _
    $region31: #{lstm_text_cls_forward.1} parent=1 // pred_check_branch
      %1836 = sbr.rel (0) target = $region33
    $region32: #{lstm_text_cls_forward.1} parent=1 // pred_region
      _
    $region33: #{lstm_text_cls_forward.1} parent=1 // pred_fallthru
      _
    // Predicated region
    $region34: #{lstm_text_cls_forward.1} parent=1 // pred_check
      _
    $region35: #{lstm_text_cls_forward.1} parent=1 // pred_check_branch
      %1838 = sbr.rel (0) target = $region37
    $region36: #{lstm_text_cls_forward.1} parent=1 // pred_region
      %s1840 = ssub.s32 32, 32
      %1841 = vsyncadd [#allocation6], %s1840
      %s1843 = sshll.u32 [#allocation7], 4
      %s1844 = int_to_ptr.vmem [resolvable:$true] %s1843
      %1846 = dma.vmem_to_hbm [thread:$0]  %s1844, 32, %s8, [#allocation6]
    $region37: #{lstm_text_cls_forward.1} parent=1 // pred_fallthru
      _
    // Predicated region
    $region38: #{lstm_text_cls_forward.1} parent=1 // pred_check
      _
    $region39: #{lstm_text_cls_forward.1} parent=1 // pred_check_branch
      %1848 = sbr.rel (0) target = $region41
    $region40: #{lstm_text_cls_forward.1} parent=1 // pred_region
      _
    $region41: #{lstm_text_cls_forward.1} parent=1 // pred_fallthru
      _
    // Predicated region
    $region42: #{lstm_text_cls_forward.1} parent=1 // pred_check
      _
    $region43: #{lstm_text_cls_forward.1} parent=1 // pred_check_branch
      %1850 = sbr.rel (0) target = $region45
    $region44: #{lstm_text_cls_forward.1} parent=1 // pred_region
      _
    $region45: #{lstm_text_cls_forward.1} parent=1 // pred_fallthru
      _
    // Predicated region
    $region46: #{lstm_text_cls_forward.1} parent=1 // pred_check
      _
    $region47: #{lstm_text_cls_forward.1} parent=1 // pred_check_branch
      %1852 = sbr.rel (0) target = $region49
    $region48: #{lstm_text_cls_forward.1} parent=1 // pred_region
      %1853 = dma.done [#allocation6], 32
    $region49: #{lstm_text_cls_forward.1} parent=1 // pred_fallthru
      _
    // Predicated region
    $region50: #{lstm_text_cls_forward.1} parent=1 // pred_check
      _
    $region51: #{lstm_text_cls_forward.1} parent=1 // pred_check_branch
      %1855 = sbr.rel (0) target = $region53
    $region52: #{lstm_text_cls_forward.1} parent=1 // pred_region
      _
    $region53: #{lstm_text_cls_forward.1} parent=1 // pred_fallthru
      _
    %1856 = vsyncpa [#allocation5], 1
    %1857 = vsyncpa [#allocation6], 1

</llo_original>
